<compile_context>
chip_gen: v7x
topology: tpu7x:2x2x1
jax: 0.10.0
libtpu: 0.0.40
codegen_flags: <defaults>
</compile_context>

<pallas_src>
import functools
import math

import jax
import jax.numpy as jnp
from jax import lax
from jax.experimental import pallas as pl
from jax.experimental.pallas import tpu as pltpu

_LANE = 128  # TPU vreg lane width


# ----------------------------------------------------------------------------- kernels


def _qkv_proj_kernel(x_ref, y_ref, wq_ref, bq_ref, wk_ref, bk_ref, wv_ref, bv_ref,
                     q_ref, k_ref, v_ref):
    """Project one (row-tile, weight-column-tile): q from y, k/v from x (head-major)."""
    f32 = jnp.float32
    x = x_ref[0]                                                    # (tp, D)
    y = y_ref[0]                                                    # (tp, D)
    q_ref[0] = (jnp.dot(y, wq_ref[...], preferred_element_type=f32)
                + bq_ref[...]).astype(q_ref.dtype)
    k_ref[0] = (jnp.dot(x, wk_ref[...], preferred_element_type=f32)
                + bk_ref[...]).astype(k_ref.dtype)
    v_ref[0] = (jnp.dot(x, wv_ref[...], preferred_element_type=f32)
                + bv_ref[...]).astype(v_ref.dtype)


def _flash_attn_kernel(q_ref, k_ref, v_ref, vals_ref, m_scr, l_scr, acc_scr, *,
                       exp_dtype, approx_recip):
    """Online-softmax attention for one (batch, head, q-tile); reduces over kv tiles."""
    ki = pl.program_id(3)
    f32 = jnp.float32

    @pl.when(ki == 0)
    def _init():
        m_scr[...] = jnp.full_like(m_scr, -jnp.inf)
        l_scr[...] = jnp.zeros_like(l_scr)
        acc_scr[...] = jnp.zeros_like(acc_scr)

    q = q_ref[0]                                                    # (tq,  hd_p)
    k = k_ref[0]                                                    # (tkv, hd_p)
    v = v_ref[0]                                                    # (tkv, hd_p)
    # q @ k^T without materializing a transpose: contract the last axes of both.
    s = lax.dot_general(q, k, (((1,), (1,)), ((), ())),
                        preferred_element_type=f32)                 # (tq, tkv)
    m_prev = m_scr[...]                                             # (tq, 1)
    m_new = jnp.maximum(m_prev, jnp.max(s, axis=-1, keepdims=True))
    alpha = jnp.exp(m_prev - m_new)                                 # (tq, 1) f32
    # Big exp in exp_dtype (bf16 on v6e/v7x: argument <= 0, range-safe);
    # accumulation of l / acc stays in f32.
    p = jnp.exp((s - m_new).astype(exp_dtype))                      # (tq, tkv)
    l_scr[...] = alpha * l_scr[...] + jnp.sum(p.astype(f32), axis=-1, keepdims=True)
    acc_scr[...] = alpha * acc_scr[...] + jnp.dot(
        p.astype(v.dtype), v, preferred_element_type=f32)           # (tq, hd_p)
    m_scr[...] = m_new

    @pl.when(ki == pl.num_programs(3) - 1)
    def _finalize():
        if approx_recip:
            vals = acc_scr[...] * pl.reciprocal(l_scr[...], approx=True)
        else:
            vals = acc_scr[...] / l_scr[...]
        vals_ref[0] = vals.astype(vals_ref.dtype)


def _out_proj_kernel(vals_ref, wo_ref, bo_ref, out_ref):
    """Output projection of one (row-tile, output-column-tile)."""
    out = jnp.dot(vals_ref[0], wo_ref[...],
                  preferred_element_type=jnp.float32) + bo_ref[...]
    out_ref[0] = out.astype(out_ref.dtype)


# ----------------------------------------------------------------------------- host-side prep


def _round_up(x, m):
    return ((x + m - 1) // m) * m


def _pick_block(size, target):
    """Largest tile <= target that divides `size` and keeps (8, 128) sublane tiling.
    Falls back to the full size when no divisor exists (fine here: per-head tiles are small)."""
    if size <= target:
        return size
    for t in range(target, 7, -8):        # multiples of 8 only
        if size % t == 0:
            return t
    return size


def _pick_col_block(d_in, d_out, granule, *, n_weights, bytes_per_el,
                    budget=8 * 1024 * 1024):
    """Largest multiple-of-`granule` divisor of d_out whose n_weights double-buffered
    (d_in, tile) weight blocks fit within `budget` bytes.  Falls back to d_out itself
    when no multiple-of-`granule` divisor exists (e.g. tiny d_model in tests)."""
    divisors = [t for t in range(granule, d_out + 1, granule) if d_out % t == 0]
    if not divisors:
        return d_out
    fitting = [t for t in divisors if n_weights * 2 * bytes_per_el * d_in * t <= budget]
    return max(fitting) if fitting else min(divisors)


def _default_exp_dtype():
    """bf16 exp only on chips with a bf16 EUP (v6e / v7x); f32 elsewhere (v5e, v4...)."""
    try:
        kind = jax.devices()[0].device_kind.lower()
    except Exception:
        return jnp.float32
    return jnp.bfloat16 if ("v6" in kind or "v7" in kind) else jnp.float32


def _prepare_params(params, num_heads, compute_dtype):
    """PyTorch nn.Linear-convention weights -> kernel layout.

    * transpose to (in_features, out_features) so projections are `x @ W`
    * de-interleave the kv projection into head-major, contiguous K / V halves
    * zero-pad each head's feature block to a multiple of 128 lanes (Wo rows padded to
      match) so per-head blocks are lane-tile aligned; padding is mathematically inert
    * fold the 1/sqrt(head_dim) softmax scale into Wq / bq (host side, f32)
    * weights cast to the MXU compute dtype; biases stay f32 (added post-accumulation).
    """
    D = params["wq"].shape[0]
    H = num_heads
    hd = D // H
    hd_p = _round_up(hd, _LANE)
    D_p = H * hd_p
    pad = hd_p - hd
    c = compute_dtype
    f32 = jnp.float32
    scale = 1.0 / math.sqrt(hd)

    # Q projection (scale folded in).
    wq_t = jnp.asarray(params["wq"], f32).T.reshape(D, H, hd) * scale
    wq_p = jnp.pad(wq_t, ((0, 0), (0, 0), (0, pad))).reshape(D, D_p)
    bq_p = jnp.pad(jnp.asarray(params["bq"], f32).reshape(H, hd) * scale,
                   ((0, 0), (0, pad))).reshape(1, D_p)

    # KV projection: de-interleave into head-major K and V halves, then pad.
    wkv_t = jnp.asarray(params["wkv"], f32).T.reshape(D, H, 2, hd)
    bkv = jnp.asarray(params["bkv"], f32).reshape(H, 2, hd)
    wk_p = jnp.pad(wkv_t[:, :, 0, :], ((0, 0), (0, 0), (0, pad))).reshape(D, D_p)
    wv_p = jnp.pad(wkv_t[:, :, 1, :], ((0, 0), (0, 0), (0, pad))).reshape(D, D_p)
    bk_p = jnp.pad(bkv[:, 0, :], ((0, 0), (0, pad))).reshape(1, D_p)
    bv_p = jnp.pad(bkv[:, 1, :], ((0, 0), (0, pad))).reshape(1, D_p)

    # Output projection: pad Wo^T rows to match the padded head-major values layout.
    wo_t = jnp.asarray(params["wo"], f32).T.reshape(H, hd, D)
    wo_p = jnp.pad(wo_t, ((0, 0), (0, pad), (0, 0))).reshape(D_p, D)
    bo = jnp.asarray(params["bo"], f32).reshape(1, D)

    return dict(wq=wq_p.astype(c), bq=bq_p, wk=wk_p.astype(c), bk=bk_p,
                wv=wv_p.astype(c), bv=bv_p, wo=wo_p.astype(c), bo=bo,
                hd_p=hd_p, D_p=D_p)


# ----------------------------------------------------------------------------- wrapper


def multi_head_cross_attention(x, y, params, *, num_heads,
                               q_block=None, kv_block=None, proj_row_block=None,
                               compute_dtype=jnp.bfloat16,
                               softmax_exp_dtype=None,
                               vmem_limit_bytes=None):
    """Fused forward of MultiHeadCrossAttention: q from y, k/v from x (mask=None path).

    x, y: (B, S, D).  params: PyTorch nn.Linear-convention weights.
    vmem_limit_bytes: optional explicit scoped-VMEM limit for all pallas_calls
    (leave None for the default; shrink tiles for very large D/S on v7x's 64 MiB).
    """
    B, S, D = x.shape
    assert y.shape == (B, S, D)
    assert D % num_heads == 0
    H = num_heads

    is_f32 = jnp.dtype(compute_dtype) == jnp.dtype(jnp.float32)
    if is_f32:
        exp_dtype = jnp.float32
    elif softmax_exp_dtype is not None:
        exp_dtype = softmax_exp_dtype
    else:
        exp_dtype = _default_exp_dtype()

    w = _prepare_params(params, H, compute_dtype)
    hd_p, D_p = w["hd_p"], w["D_p"]
    out_dtype = x.dtype

    # Cast activations once in the wrapper (halves activation DMA + VMEM, no in-kernel casts).
    xc = x.astype(compute_dtype)
    yc = y.astype(compute_dtype)

    tp = proj_row_block or _pick_block(S, 512)
    tq = q_block or _pick_block(S, 512)
    tkv = kv_block or _pick_block(S, 1024)
    assert S % tp == 0 and S % tq == 0 and S % tkv == 0
    nrows, nq, nkv = S // tp, S // tq, S // tkv

    itemsize = jnp.dtype(compute_dtype).itemsize
    cparams = dict(vmem_limit_bytes=vmem_limit_bytes) if vmem_limit_bytes else {}

    # ---- 1) QKV projection: each sequence row tile projected exactly once -----------------
    tn = _pick_col_block(D, D_p, hd_p, n_weights=3, bytes_per_el=itemsize)
    ncols = D_p // tn
    q, k, v = pl.pallas_call(
        _qkv_proj_kernel,
        out_shape=[jax.ShapeDtypeStruct((B, S, D_p), compute_dtype) for _ in range(3)],
        grid_spec=pltpu.PrefetchScalarGridSpec(
            num_scalar_prefetch=0,
            grid=(ncols, B, nrows),                   # weight-column axis outermost
            in_specs=[
                pl.BlockSpec((1, tp, D), lambda ci, b, ri: (b, ri, 0)),   # x  (K/V source)
                pl.BlockSpec((1, tp, D), lambda ci, b, ri: (b, ri, 0)),   # y  (Q source)
                pl.BlockSpec((D, tn), lambda ci, b, ri: (0, ci)),         # wq (scaled)
                pl.BlockSpec((1, tn), lambda ci, b, ri: (0, ci)),         # bq
                pl.BlockSpec((D, tn), lambda ci, b, ri: (0, ci)),         # wk
                pl.BlockSpec((1, tn), lambda ci, b, ri: (0, ci)),         # bk
                pl.BlockSpec((D, tn), lambda ci, b, ri: (0, ci)),         # wv
                pl.BlockSpec((1, tn), lambda ci, b, ri: (0, ci)),         # bv
            ],
            out_specs=[pl.BlockSpec((1, tp, tn), lambda ci, b, ri: (b, ri, ci))
                       for _ in range(3)],
        ),
        compiler_params=pltpu.CompilerParams(
            dimension_semantics=("parallel", "parallel", "parallel"), **cparams),
    )(xc, yc, w["wq"], w["bq"], w["wk"], w["bk"], w["wv"], w["bv"])

    # ---- 2) Flash attention: heads on the grid, zero weights in VMEM ----------------------
    attn_kernel = functools.partial(_flash_attn_kernel,
                                    exp_dtype=exp_dtype, approx_recip=not is_f32)
    values = pl.pallas_call(
        attn_kernel,
        out_shape=jax.ShapeDtypeStruct((B, S, D_p), compute_dtype),
        grid_spec=pltpu.PrefetchScalarGridSpec(
            num_scalar_prefetch=0,
            grid=(B, H, nq, nkv),                     # kv reduction axis innermost
            in_specs=[
                pl.BlockSpec((1, tq, hd_p), lambda b, h, qi, ki: (b, qi, h)),   # q
                pl.BlockSpec((1, tkv, hd_p), lambda b, h, qi, ki: (b, ki, h)),  # k
                pl.BlockSpec((1, tkv, hd_p), lambda b, h, qi, ki: (b, ki, h)),  # v
            ],
            out_specs=pl.BlockSpec((1, tq, hd_p), lambda b, h, qi, ki: (b, qi, h)),
            scratch_shapes=[
                pltpu.VMEM((tq, 1), jnp.float32),     # running max
                pltpu.VMEM((tq, 1), jnp.float32),     # running sum
                pltpu.VMEM((tq, hd_p), jnp.float32),  # value accumulator
            ],
        ),
        compiler_params=pltpu.CompilerParams(
            dimension_semantics=("parallel", "parallel", "parallel", "arbitrary"),
            **cparams),
    )(q, k, v)

    # ---- 3) Output projection (lane-dense tiles) -------------------------------------------
    tno = _pick_col_block(D_p, D, _LANE, n_weights=1, bytes_per_el=itemsize)
    nco = D // tno
    out = pl.pallas_call(
        _out_proj_kernel,
        out_shape=jax.ShapeDtypeStruct((B, S, D), out_dtype),
        grid_spec=pltpu.PrefetchScalarGridSpec(
            num_scalar_prefetch=0,
            grid=(nco, B, nrows),
            in_specs=[
                pl.BlockSpec((1, tp, D_p), lambda ci, b, ri: (b, ri, 0)),   # values
                pl.BlockSpec((D_p, tno), lambda ci, b, ri: (0, ci)),        # wo
                pl.BlockSpec((1, tno), lambda ci, b, ri: (0, ci)),          # bo
            ],
            out_specs=pl.BlockSpec((1, tp, tno), lambda ci, b, ri: (b, ri, ci)),
        ),
        compiler_params=pltpu.CompilerParams(
            dimension_semantics=("parallel", "parallel", "parallel"), **cparams),
    )(values, w["wo"], w["bo"])
    return out


# ----------------------------------------------------------------------------- reference & test


def _reference(x, y, params, *, num_heads):
    """Pure-JAX reference mirroring the PyTorch forward (mask=None)."""
    B, S, D = x.shape
    hd = D // num_heads
    q = y @ params["wq"].T + params["bq"]
    kv = x @ params["wkv"].T + params["bkv"]
    q = q.reshape(B, S, num_heads, hd).transpose(0, 2, 1, 3)
    kv = kv.reshape(B, S, num_heads, 2 * hd).transpose(0, 2, 1, 3)
    k, v = kv[..., :hd], kv[..., hd:]
    scaled = jnp.einsum("bhqd,bhkd->bhqk", q, k) / math.sqrt(hd)
    attn = jax.nn.softmax(scaled, axis=-1)
    vals = jnp.einsum("bhqk,bhkd->bhqd", attn, v)
    vals = vals.transpose(0, 2, 1, 3).reshape(B, S, D)
    return vals @ params["wo"].T + params["bo"]


def _init_params(key, d_model):
    """Deterministic init, PyTorch nn.Linear-style uniform(-1/sqrt(fan_in), ...)."""
    ks = jax.random.split(key, 6)
    bound = 1.0 / math.sqrt(d_model)
    u = lambda k, shape: jax.random.uniform(k, shape, jnp.float32, -bound, bound)
    return {
        "wq": u(ks[0], (d_model, d_model)),
        "bq": u(ks[1], (d_model,)),
        "wkv": u(ks[2], (2 * d_model, d_model)),
        "bkv": u(ks[3], (2 * d_model,)),
        "wo": u(ks[4], (d_model, d_model)),
        "bo": u(ks[5], (d_model,)),
    }


if __name__ == "__main__":
    key = jax.random.PRNGKey(0)

    # Config 1: padded heads (head_dim 8 -> 128 lanes), multiple q / kv tiles.
    B, S, D, H = 2, 16, 32, 4
    kx, ky, kp, k2 = jax.random.split(key, 4)
    x = jax.random.normal(kx, (B, S, D), jnp.float32)
    y = jax.random.normal(ky, (B, S, D), jnp.float32)
    params = _init_params(kp, D)
    ref = _reference(x, y, params, num_heads=H)

    # f32 MXU path (exact reciprocal, f32 exp): tighter check.
    out_f32 = jax.block_until_ready(
        multi_head_cross_attention(x, y, params, num_heads=H,
                                   q_block=8, kv_block=8,
                                   compute_dtype=jnp.float32))
    assert out_f32.shape == (B, S, D)
    assert jnp.allclose(out_f32, ref, atol=1e-2, rtol=1e-2), "f32 mismatch vs reference"

    # Default bf16-MXU / f32-accumulate path (bf16 exp auto-enabled on v6e/v7x).
    out_bf16 = jax.block_until_ready(
        multi_head_cross_attention(x, y, params, num_heads=H,
                                   q_block=8, kv_block=8))
    assert out_bf16.shape == (B, S, D)
    assert jnp.allclose(out_bf16, ref, atol=5e-2, rtol=5e-2), "bf16 mismatch vs reference"

    # Config 2: unpadded heads (head_dim = 128), default tile selection.
    B2, S2, D2, H2 = 1, 16, 256, 2
    kx2, ky2, kp2 = jax.random.split(k2, 3)
    x2 = jax.random.normal(kx2, (B2, S2, D2), jnp.float32)
    y2 = jax.random.normal(ky2, (B2, S2, D2), jnp.float32)
    params2 = _init_params(kp2, D2)
    ref2 = _reference(x2, y2, params2, num_heads=H2)
    out2 = jax.block_until_ready(
        multi_head_cross_attention(x2, y2, params2, num_heads=H2))
    assert out2.shape == (B2, S2, D2)
    assert jnp.allclose(out2, ref2, atol=5e-2, rtol=5e-2), "config-2 mismatch vs reference"

    print("KERNEL_OK")
</pallas_src>

<mosaic_0001>
module attributes {stable_mosaic.version = 11 : i64} {
  func.func @_qkv_proj_kernel(%arg0: i32, %arg1: i32, %arg2: i32, %arg3: memref<1x16x32xf32, #tpu.memory_space<vmem>>, %arg4: memref<1x16x32xf32, #tpu.memory_space<vmem>>, %arg5: memref<32x512xf32, #tpu.memory_space<vmem>>, %arg6: memref<1x512xf32, #tpu.memory_space<vmem>>, %arg7: memref<32x512xf32, #tpu.memory_space<vmem>>, %arg8: memref<1x512xf32, #tpu.memory_space<vmem>>, %arg9: memref<32x512xf32, #tpu.memory_space<vmem>>, %arg10: memref<1x512xf32, #tpu.memory_space<vmem>>, %arg11: memref<1x16x512xf32, #tpu.memory_space<vmem>>, %arg12: memref<1x16x512xf32, #tpu.memory_space<vmem>>, %arg13: memref<1x16x512xf32, #tpu.memory_space<vmem>>) attributes {dimension_semantics = [#tpu.dimension_semantics<parallel>, #tpu.dimension_semantics<parallel>, #tpu.dimension_semantics<parallel>], iteration_bounds = array<i64: 1, 2, 1>, scalar_prefetch = 0 : i64, scratch_operands = 0 : i64, tpu.core_type = #tpu.core_type<tc>, window_params = [{transform_indices = @transform_0, window_bounds = array<i64: 1, 16, 32>}, {transform_indices = @transform_1, window_bounds = array<i64: 1, 16, 32>}, {transform_indices = @transform_2, window_bounds = array<i64: 32, 512>}, {transform_indices = @transform_3, window_bounds = array<i64: 1, 512>}, {transform_indices = @transform_4, window_bounds = array<i64: 32, 512>}, {transform_indices = @transform_5, window_bounds = array<i64: 1, 512>}, {transform_indices = @transform_6, window_bounds = array<i64: 32, 512>}, {transform_indices = @transform_7, window_bounds = array<i64: 1, 512>}, {transform_indices = @transform_8, window_bounds = array<i64: 1, 16, 512>}, {transform_indices = @transform_9, window_bounds = array<i64: 1, 16, 512>}, {transform_indices = @transform_10, window_bounds = array<i64: 1, 16, 512>}]} {
    %c0 = arith.constant 0 : index
    %c0_0 = arith.constant 0 : index
    %c0_1 = arith.constant 0 : index
    %0 = vector.load %arg3[%c0, %c0_0, %c0_1] : memref<1x16x32xf32, #tpu.memory_space<vmem>>, vector<1x16x32xf32>
    %1 = vector.shape_cast %0 : vector<1x16x32xf32> to vector<16x32xf32>
    %c0_2 = arith.constant 0 : index
    %c0_3 = arith.constant 0 : index
    %c0_4 = arith.constant 0 : index
    %2 = vector.load %arg4[%c0_2, %c0_3, %c0_4] : memref<1x16x32xf32, #tpu.memory_space<vmem>>, vector<1x16x32xf32>
    %3 = vector.shape_cast %2 : vector<1x16x32xf32> to vector<16x32xf32>
    %c0_5 = arith.constant 0 : index
    %c0_6 = arith.constant 0 : index
    %4 = vector.load %arg5[%c0_5, %c0_6] : memref<32x512xf32, #tpu.memory_space<vmem>>, vector<32x512xf32>
    %cst = arith.constant dense<0.000000e+00> : vector<16x512xf32>
    %5 = tpu.matmul %3, %4, %cst {dimension_numbers = #tpu.dot_dimension_numbers<[1], [0], [0], [1], [0, 0, 1, 1], [], []>} : vector<16x32xf32>, vector<32x512xf32>, vector<16x512xf32> -> vector<16x512xf32>
    %c0_7 = arith.constant 0 : index
    %c0_8 = arith.constant 0 : index
    %6 = vector.load %arg6[%c0_7, %c0_8] : memref<1x512xf32, #tpu.memory_space<vmem>>, vector<1x512xf32>
    %7 = vector.broadcast %6 : vector<1x512xf32> to vector<16x512xf32>
    %8 = arith.addf %5, %7 : vector<16x512xf32>
    %c0_9 = arith.constant 0 : index
    %c0_10 = arith.constant 0 : index
    %c0_11 = arith.constant 0 : index
    %9 = vector.load %arg11[%c0_9, %c0_10, %c0_11] : memref<1x16x512xf32, #tpu.memory_space<vmem>>, vector<1x16x512xf32>
    %10 = vector.shape_cast %9 : vector<1x16x512xf32> to vector<16x512xf32>
    %11 = vector.shape_cast %8 : vector<16x512xf32> to vector<1x16x512xf32>
    tpu.vector_store %arg11[%c0_9, %c0_10, %c0_11], %11 {strides = array<i32>} : memref<1x16x512xf32, #tpu.memory_space<vmem>>, vector<1x16x512xf32>,
    %c0_12 = arith.constant 0 : index
    %c0_13 = arith.constant 0 : index
    %12 = vector.load %arg7[%c0_12, %c0_13] : memref<32x512xf32, #tpu.memory_space<vmem>>, vector<32x512xf32>
    %cst_14 = arith.constant dense<0.000000e+00> : vector<16x512xf32>
    %13 = tpu.matmul %1, %12, %cst_14 {dimension_numbers = #tpu.dot_dimension_numbers<[1], [0], [0], [1], [0, 0, 1, 1], [], []>} : vector<16x32xf32>, vector<32x512xf32>, vector<16x512xf32> -> vector<16x512xf32>
    %c0_15 = arith.constant 0 : index
    %c0_16 = arith.constant 0 : index
    %14 = vector.load %arg8[%c0_15, %c0_16] : memref<1x512xf32, #tpu.memory_space<vmem>>, vector<1x512xf32>
    %15 = vector.broadcast %14 : vector<1x512xf32> to vector<16x512xf32>
    %16 = arith.addf %13, %15 : vector<16x512xf32>
    %c0_17 = arith.constant 0 : index
    %c0_18 = arith.constant 0 : index
    %c0_19 = arith.constant 0 : index
    %17 = vector.load %arg12[%c0_17, %c0_18, %c0_19] : memref<1x16x512xf32, #tpu.memory_space<vmem>>, vector<1x16x512xf32>
    %18 = vector.shape_cast %17 : vector<1x16x512xf32> to vector<16x512xf32>
    %19 = vector.shape_cast %16 : vector<16x512xf32> to vector<1x16x512xf32>
    tpu.vector_store %arg12[%c0_17, %c0_18, %c0_19], %19 {strides = array<i32>} : memref<1x16x512xf32, #tpu.memory_space<vmem>>, vector<1x16x512xf32>,
    %c0_20 = arith.constant 0 : index
    %c0_21 = arith.constant 0 : index
    %20 = vector.load %arg9[%c0_20, %c0_21] : memref<32x512xf32, #tpu.memory_space<vmem>>, vector<32x512xf32>
    %cst_22 = arith.constant dense<0.000000e+00> : vector<16x512xf32>
    %21 = tpu.matmul %1, %20, %cst_22 {dimension_numbers = #tpu.dot_dimension_numbers<[1], [0], [0], [1], [0, 0, 1, 1], [], []>} : vector<16x32xf32>, vector<32x512xf32>, vector<16x512xf32> -> vector<16x512xf32>
    %c0_23 = arith.constant 0 : index
    %c0_24 = arith.constant 0 : index
    %22 = vector.load %arg10[%c0_23, %c0_24] : memref<1x512xf32, #tpu.memory_space<vmem>>, vector<1x512xf32>
    %23 = vector.broadcast %22 : vector<1x512xf32> to vector<16x512xf32>
    %24 = arith.addf %21, %23 : vector<16x512xf32>
    %c0_25 = arith.constant 0 : index
    %c0_26 = arith.constant 0 : index
    %c0_27 = arith.constant 0 : index
    %25 = vector.load %arg13[%c0_25, %c0_26, %c0_27] : memref<1x16x512xf32, #tpu.memory_space<vmem>>, vector<1x16x512xf32>
    %26 = vector.shape_cast %25 : vector<1x16x512xf32> to vector<16x512xf32>
    %27 = vector.shape_cast %24 : vector<16x512xf32> to vector<1x16x512xf32>
    tpu.vector_store %arg13[%c0_25, %c0_26, %c0_27], %27 {strides = array<i32>} : memref<1x16x512xf32, #tpu.memory_space<vmem>>, vector<1x16x512xf32>,
    return
  }
  func.func @transform_0(%arg0: i32, %arg1: i32, %arg2: i32) -> (i32, i32, i32) {
    %c0_i32 = arith.constant 0 : i32
    %c0_i32_0 = arith.constant 0 : i32
    return %arg1, %arg2, %c0_i32 : i32, i32, i32
  }
  func.func @transform_1(%arg0: i32, %arg1: i32, %arg2: i32) -> (i32, i32, i32) {
    %c0_i32 = arith.constant 0 : i32
    %c0_i32_0 = arith.constant 0 : i32
    return %arg1, %arg2, %c0_i32 : i32, i32, i32
  }
  func.func @transform_2(%arg0: i32, %arg1: i32, %arg2: i32) -> (i32, i32) {
    %c0_i32 = arith.constant 0 : i32
    %c0_i32_0 = arith.constant 0 : i32
    return %c0_i32, %arg0 : i32, i32
  }
  func.func @transform_3(%arg0: i32, %arg1: i32, %arg2: i32) -> (i32, i32) {
    %c0_i32 = arith.constant 0 : i32
    %c0_i32_0 = arith.constant 0 : i32
    return %c0_i32, %arg0 : i32, i32
  }
  func.func @transform_4(%arg0: i32, %arg1: i32, %arg2: i32) -> (i32, i32) {
    %c0_i32 = arith.constant 0 : i32
    %c0_i32_0 = arith.constant 0 : i32
    return %c0_i32, %arg0 : i32, i32
  }
  func.func @transform_5(%arg0: i32, %arg1: i32, %arg2: i32) -> (i32, i32) {
    %c0_i32 = arith.constant 0 : i32
    %c0_i32_0 = arith.constant 0 : i32
    return %c0_i32, %arg0 : i32, i32
  }
  func.func @transform_6(%arg0: i32, %arg1: i32, %arg2: i32) -> (i32, i32) {
    %c0_i32 = arith.constant 0 : i32
    %c0_i32_0 = arith.constant 0 : i32
    return %c0_i32, %arg0 : i32, i32
  }
  func.func @transform_7(%arg0: i32, %arg1: i32, %arg2: i32) -> (i32, i32) {
    %c0_i32 = arith.constant 0 : i32
    %c0_i32_0 = arith.constant 0 : i32
    return %c0_i32, %arg0 : i32, i32
  }
  func.func @transform_8(%arg0: i32, %arg1: i32, %arg2: i32) -> (i32, i32, i32) {
    %c0_i32 = arith.constant 0 : i32
    return %arg1, %arg2, %arg0 : i32, i32, i32
  }
  func.func @transform_9(%arg0: i32, %arg1: i32, %arg2: i32) -> (i32, i32, i32) {
    %c0_i32 = arith.constant 0 : i32
    return %arg1, %arg2, %arg0 : i32, i32, i32
  }
  func.func @transform_10(%arg0: i32, %arg1: i32, %arg2: i32) -> (i32, i32, i32) {
    %c0_i32 = arith.constant 0 : i32
    return %arg1, %arg2, %arg0 : i32, i32, i32
  }
}

</mosaic_0001>

<llo_original>
// kernel: tpu_custom_call.1
$region0: #{tpu_custom_call.1}
  #allocation0 [shape = 'u32[]', space=smem, size = 0x4, offset = 0x4, fixed_abs, tag = 'smem constant byte address 0x4 - core index']
  #allocation1 [shape = 'u32[144,128]{1,0:T(1,128)}', space=vmem, size = 0x12000, scoped, tag = 'internal scratch']
  %s0 = inlined_call_operand.hbm [shape: f32[2,16,32], index: 0, kind: input, shape index: {}]
  %s1 = inlined_call_operand.hbm [shape: f32[2,16,32], index: 1, kind: input, shape index: {}]
  %s2 = inlined_call_operand.hbm [shape: f32[32,512], index: 2, kind: input, shape index: {}]
  %s3 = inlined_call_operand.vmem [shape: f32[1,512], index: 3, kind: input, shape index: {}]
  %s4 = inlined_call_operand.hbm [shape: f32[32,512], index: 4, kind: input, shape index: {}]
  %s5 = inlined_call_operand.vmem [shape: f32[1,512], index: 5, kind: input, shape index: {}]
  %s6 = inlined_call_operand.hbm [shape: f32[32,512], index: 6, kind: input, shape index: {}]
  %s7 = inlined_call_operand.vmem [shape: f32[1,512], index: 7, kind: input, shape index: {}]
  %s8 = inlined_call_operand.hbm [shape: f32[2,16,512], index: 8, kind: output, shape index: {0}]
  %s9 = inlined_call_operand.hbm [shape: f32[2,16,512], index: 9, kind: output, shape index: {1}]
  %s10 = inlined_call_operand.hbm [shape: f32[2,16,512], index: 10, kind: output, shape index: {2}]
  %11 = xla_tuple %s8, %s9, %s10
  %s12 = sld [smem:[#allocation0]]
  $region101: #{tpu_custom_call.1} parent=0
    _
  %s14 = ssub.s32 1, %s12
  %s15 = scalar_select 0, %s14, %s12
  $region1: #{tpu_custom_call.1} parent=0
    #allocation2 [shape = 'u8[16384]{0}', space=vmem, size = 0x4000, scoped, tag = 'input window, operand 0']
    #allocation3 [shape = 's32[2]{0}', space=sflag, size = 0x8, scoped, tag = 'scoped memory for tpu_custom_call.1']
    #allocation4 [shape = 's32[2]{0}', space=sflag, size = 0x8, scoped, tag = 'scoped memory for tpu_custom_call.1']
    #allocation5 [shape = 'u8[16384]{0}', space=vmem, size = 0x4000, scoped, tag = 'input window, operand 1']
    #allocation6 [shape = 's32[2]{0}', space=sflag, size = 0x8, scoped, tag = 'scoped memory for tpu_custom_call.1']
    #allocation7 [shape = 'u8[65536]{0}', space=vmem, size = 0x10000, scoped, tag = 'input window, operand 2, single buffered']
    #allocation8 [shape = 'u8[65536]{0}', space=vmem, size = 0x10000, scoped, tag = 'input window, operand 4, single buffered']
    #allocation9 [shape = 's32[1]{0}', space=sflag, size = 0x4, scoped, tag = 'scoped memory for tpu_custom_call.1']
    #allocation10 [shape = 'u8[65536]{0}', space=vmem, size = 0x10000, scoped, tag = 'input window, operand 6, single buffered']
    #allocation11 [shape = 'u8[65536]{0}', space=vmem, size = 0x10000, scoped, tag = 'output window, operand 0']
    #allocation12 [shape = 'u8[65536]{0}', space=vmem, size = 0x10000, scoped, tag = 'output window, operand 1']
    #allocation13 [shape = 's32[2]{0}', space=sflag, size = 0x8, scoped, tag = 'scoped memory for tpu_custom_call.1']
    #allocation14 [shape = 'u8[65536]{0}', space=vmem, size = 0x10000, scoped, tag = 'output window, operand 2']
    %16 = vsyncpa [#allocation3], 0
    %s17 = scalar_lea.sflag [#allocation3], 1
    %18 = vsyncpa %s17, 0
    %19 = vsyncpa [#allocation6], 0
    %s20 = scalar_lea.sflag [#allocation6], 1
    %21 = vsyncpa %s20, 0
    %22 = vsyncpa [#allocation9], 0
    %23 = vsyncpa [#allocation4], 0
    %s24 = scalar_lea.sflag [#allocation4], 1
    %25 = vsyncpa %s24, 0
    %26 = vsyncpa [#allocation13], 0
    %s27 = scalar_lea.sflag [#allocation13], 1
    %28 = vsyncpa %s27, 0
    loop: start=0, step=1, limit=4
    $region2: #{tpu_custom_call.1} parent=1 // loop_pre_header
      _
    $region3: #{tpu_custom_call.1} parent=1 // loop_header
      %s30 = sphi 0, %s34
      %p31 = scmp.ge.s32.totalorder %s30, 4
      %s37 = sphi 0, %s56
      %s38 = sphi 0, %s52
      %s39 = sphi 0, %s48
      %s40 = sphi 0, %s37
      %s41 = sphi 0, %s38
      %s42 = sphi 0, %s39
      %s43 = sphi 0, %s40
      %s44 = sphi 0, %s41
      %s45 = sphi 0, %s42
      %s61 = sphi 0, %s63
      %s64 = sphi 0, %s61
      %s65 = sphi 0, %s64
      %s81 = sphi 0, %s65
      %s89 = sphi 0, %s91
      %s92 = sphi 0, %s89
      %s93 = sphi 0, %s92
      %s109 = sphi 0, %s93
      %s115 = sphi 0, %s117
      %s118 = sphi 0, %s115
      %s119 = sphi 0, %s118
      %s135 = sphi 0, %s119
      %s141 = sphi 0, %s143
      %s144 = sphi 0, %s141
      %s145 = sphi 0, %s144
      %s161 = sphi 0, %s145
      %s167 = sphi 0, %s169
      %s170 = sphi 0, %s167
      %s171 = sphi 0, %s170
      %s187 = sphi 0, %s171
      %s193 = sphi 0, %s195
      %s196 = sphi 0, %s193
      %s197 = sphi 0, %s196
      %s213 = sphi 0, %s197
      %s219 = sphi 0, %s221
      %s222 = sphi 0, %s219
      %s223 = sphi 0, %s222
      %s239 = sphi 0, %s223
      %s245 = sphi 0, %s247
      %s248 = sphi 0, %s245
      %s249 = sphi 0, %s248
      %s265 = sphi 0, %s249
      %s275 = sphi 0, %s277
      %s278 = sphi 0, %s275
      %s279 = sphi 0, %s278
      %s295 = sphi 0, %s279
      %s305 = sphi 0, %s307
      %s308 = sphi 0, %s305
      %s309 = sphi 0, %s308
      %s325 = sphi 0, %s309
      %s335 = sphi 0, %s337
      %s338 = sphi 0, %s335
      %s339 = sphi 0, %s338
      %s355 = sphi 0, %s339
    $region4: #{tpu_custom_call.1} parent=1 // loop_header_branch
      %33 = sbr.rel (%p31) target = $region8
    $region5: #{tpu_custom_call.1} parent=1 // loop_body
      %s35 = ssub.s32 %s30, 1
      %s36 = ssub.s32 %s30, 2
      %s46 = sadd.s32 1, %s39
      %p47 = scmp.ge.s32.totalorder %s46, 1
      %s48 = scalar_select %p47, 0, %s46
      %s49 = sadd.s32 1, %s38
      %s50 = scalar_select %p47, %s49, %s38
      %p51 = scmp.ge.s32.totalorder %s50, 2
      %s52 = scalar_select %p51, 0, %s50
      %s53 = sadd.s32 1, %s37
      %s54 = scalar_select %p51, %s53, %s37
      %p55 = scmp.ge.s32.totalorder %s54, 1
      %s56 = scalar_select %p55, 0, %s54
      %s57 = ssub.s32 %s38, %s52
      %s58 = ssub.s32 %s39, %s48
      %s59 = sor.u32 %s57, %s58
      %p60 = scmp.eq.s32.totalorder %s59, 0
      %s62 = sadd.s32 %s61, 1
      %s63 = scalar_select %p60, %s61, %s62
      %p66 = pneg %p60
      %p67 = scmp.eq.s32.totalorder %s30, 1
      %p68 = por %p66, %p67
      %p69 = scmp.ne.s32.totalorder %s61, %s64
      %p70 = scmp.eq.s32.totalorder %s30, 0
      %p71 = por %p69, %p70
      %p72 = scmp.ne.s32.totalorder %s61, %s64
      %p73 = scmp.eq.s32.totalorder %s35, 1
      %p74 = por %p72, %p73
      %p75 = scmp.ne.s32.totalorder %s64, %s65
      %p76 = scmp.eq.s32.totalorder %s35, 0
      %p77 = por %p75, %p76
      %p78 = scmp.ne.s32.totalorder %s64, %s65
      %p79 = scmp.eq.s32.totalorder %s36, 1
      %p80 = por %p78, %p79
      %p82 = scmp.ne.s32.totalorder %s65, %s81
      %p83 = scmp.eq.s32.totalorder %s36, 0
      %p84 = por %p82, %p83
      %s85 = ssub.s32 %s38, %s52
      %s86 = ssub.s32 %s39, %s48
      %s87 = sor.u32 %s85, %s86
      %p88 = scmp.eq.s32.totalorder %s87, 0
      %s90 = sadd.s32 %s89, 1
      %s91 = scalar_select %p88, %s89, %s90
      %p94 = pneg %p88
      %p95 = scmp.eq.s32.totalorder %s30, 1
      %p96 = por %p94, %p95
      %p97 = scmp.ne.s32.totalorder %s89, %s92
      %p98 = scmp.eq.s32.totalorder %s30, 0
      %p99 = por %p97, %p98
      %p100 = scmp.ne.s32.totalorder %s89, %s92
      %p101 = scmp.eq.s32.totalorder %s35, 1
      %p102 = por %p100, %p101
      %p103 = scmp.ne.s32.totalorder %s92, %s93
      %p104 = scmp.eq.s32.totalorder %s35, 0
      %p105 = por %p103, %p104
      %p106 = scmp.ne.s32.totalorder %s92, %s93
      %p107 = scmp.eq.s32.totalorder %s36, 1
      %p108 = por %p106, %p107
      %p110 = scmp.ne.s32.totalorder %s93, %s109
      %p111 = scmp.eq.s32.totalorder %s36, 0
      %p112 = por %p110, %p111
      %s113 = ssub.s32 %s37, %s56
      %p114 = scmp.eq.s32.totalorder %s113, 0
      %s116 = sadd.s32 %s115, 1
      %s117 = scalar_select %p114, %s115, %s116
      %p120 = pneg %p114
      %p121 = scmp.eq.s32.totalorder %s30, 1
      %p122 = por %p120, %p121
      %p123 = scmp.ne.s32.totalorder %s115, %s118
      %p124 = scmp.eq.s32.totalorder %s30, 0
      %p125 = por %p123, %p124
      %p126 = scmp.ne.s32.totalorder %s115, %s118
      %p127 = scmp.eq.s32.totalorder %s35, 1
      %p128 = por %p126, %p127
      %p129 = scmp.ne.s32.totalorder %s118, %s119
      %p130 = scmp.eq.s32.totalorder %s35, 0
      %p131 = por %p129, %p130
      %p132 = scmp.ne.s32.totalorder %s118, %s119
      %p133 = scmp.eq.s32.totalorder %s36, 1
      %p134 = por %p132, %p133
      %p136 = scmp.ne.s32.totalorder %s119, %s135
      %p137 = scmp.eq.s32.totalorder %s36, 0
      %p138 = por %p136, %p137
      %s139 = ssub.s32 %s37, %s56
      %p140 = scmp.eq.s32.totalorder %s139, 0
      %s142 = sadd.s32 %s141, 1
      %s143 = scalar_select %p140, %s141, %s142
      %p146 = pneg %p140
      %p147 = scmp.eq.s32.totalorder %s30, 1
      %p148 = por %p146, %p147
      %p149 = scmp.ne.s32.totalorder %s141, %s144
      %p150 = scmp.eq.s32.totalorder %s30, 0
      %p151 = por %p149, %p150
      %p152 = scmp.ne.s32.totalorder %s141, %s144
      %p153 = scmp.eq.s32.totalorder %s35, 1
      %p154 = por %p152, %p153
      %p155 = scmp.ne.s32.totalorder %s144, %s145
      %p156 = scmp.eq.s32.totalorder %s35, 0
      %p157 = por %p155, %p156
      %p158 = scmp.ne.s32.totalorder %s144, %s145
      %p159 = scmp.eq.s32.totalorder %s36, 1
      %p160 = por %p158, %p159
      %p162 = scmp.ne.s32.totalorder %s145, %s161
      %p163 = scmp.eq.s32.totalorder %s36, 0
      %p164 = por %p162, %p163
      %s165 = ssub.s32 %s37, %s56
      %p166 = scmp.eq.s32.totalorder %s165, 0
      %s168 = sadd.s32 %s167, 1
      %s169 = scalar_select %p166, %s167, %s168
      %p172 = pneg %p166
      %p173 = scmp.eq.s32.totalorder %s30, 1
      %p174 = por %p172, %p173
      %p175 = scmp.ne.s32.totalorder %s167, %s170
      %p176 = scmp.eq.s32.totalorder %s30, 0
      %p177 = por %p175, %p176
      %p178 = scmp.ne.s32.totalorder %s167, %s170
      %p179 = scmp.eq.s32.totalorder %s35, 1
      %p180 = por %p178, %p179
      %p181 = scmp.ne.s32.totalorder %s170, %s171
      %p182 = scmp.eq.s32.totalorder %s35, 0
      %p183 = por %p181, %p182
      %p184 = scmp.ne.s32.totalorder %s170, %s171
      %p185 = scmp.eq.s32.totalorder %s36, 1
      %p186 = por %p184, %p185
      %p188 = scmp.ne.s32.totalorder %s171, %s187
      %p189 = scmp.eq.s32.totalorder %s36, 0
      %p190 = por %p188, %p189
      %s191 = ssub.s32 %s37, %s56
      %p192 = scmp.eq.s32.totalorder %s191, 0
      %s194 = sadd.s32 %s193, 1
      %s195 = scalar_select %p192, %s193, %s194
      %p198 = pneg %p192
      %p199 = scmp.eq.s32.totalorder %s30, 1
      %p200 = por %p198, %p199
      %p201 = scmp.ne.s32.totalorder %s193, %s196
      %p202 = scmp.eq.s32.totalorder %s30, 0
      %p203 = por %p201, %p202
      %p204 = scmp.ne.s32.totalorder %s193, %s196
      %p205 = scmp.eq.s32.totalorder %s35, 1
      %p206 = por %p204, %p205
      %p207 = scmp.ne.s32.totalorder %s196, %s197
      %p208 = scmp.eq.s32.totalorder %s35, 0
      %p209 = por %p207, %p208
      %p210 = scmp.ne.s32.totalorder %s196, %s197
      %p211 = scmp.eq.s32.totalorder %s36, 1
      %p212 = por %p210, %p211
      %p214 = scmp.ne.s32.totalorder %s197, %s213
      %p215 = scmp.eq.s32.totalorder %s36, 0
      %p216 = por %p214, %p215
      %s217 = ssub.s32 %s37, %s56
      %p218 = scmp.eq.s32.totalorder %s217, 0
      %s220 = sadd.s32 %s219, 1
      %s221 = scalar_select %p218, %s219, %s220
      %p224 = pneg %p218
      %p225 = scmp.eq.s32.totalorder %s30, 1
      %p226 = por %p224, %p225
      %p227 = scmp.ne.s32.totalorder %s219, %s222
      %p228 = scmp.eq.s32.totalorder %s30, 0
      %p229 = por %p227, %p228
      %p230 = scmp.ne.s32.totalorder %s219, %s222
      %p231 = scmp.eq.s32.totalorder %s35, 1
      %p232 = por %p230, %p231
      %p233 = scmp.ne.s32.totalorder %s222, %s223
      %p234 = scmp.eq.s32.totalorder %s35, 0
      %p235 = por %p233, %p234
      %p236 = scmp.ne.s32.totalorder %s222, %s223
      %p237 = scmp.eq.s32.totalorder %s36, 1
      %p238 = por %p236, %p237
      %p240 = scmp.ne.s32.totalorder %s223, %s239
      %p241 = scmp.eq.s32.totalorder %s36, 0
      %p242 = por %p240, %p241
      %s243 = ssub.s32 %s37, %s56
      %p244 = scmp.eq.s32.totalorder %s243, 0
      %s246 = sadd.s32 %s245, 1
      %s247 = scalar_select %p244, %s245, %s246
      %p250 = pneg %p244
      %p251 = scmp.eq.s32.totalorder %s30, 1
      %p252 = por %p250, %p251
      %p253 = scmp.ne.s32.totalorder %s245, %s248
      %p254 = scmp.eq.s32.totalorder %s30, 0
      %p255 = por %p253, %p254
      %p256 = scmp.ne.s32.totalorder %s245, %s248
      %p257 = scmp.eq.s32.totalorder %s35, 1
      %p258 = por %p256, %p257
      %p259 = scmp.ne.s32.totalorder %s248, %s249
      %p260 = scmp.eq.s32.totalorder %s35, 0
      %p261 = por %p259, %p260
      %p262 = scmp.ne.s32.totalorder %s248, %s249
      %p263 = scmp.eq.s32.totalorder %s36, 1
      %p264 = por %p262, %p263
      %p266 = scmp.ne.s32.totalorder %s249, %s265
      %p267 = scmp.eq.s32.totalorder %s36, 0
      %p268 = por %p266, %p267
      %s269 = ssub.s32 %s38, %s52
      %s270 = ssub.s32 %s39, %s48
      %s271 = sor.u32 %s269, %s270
      %s272 = ssub.s32 %s37, %s56
      %s273 = sor.u32 %s271, %s272
      %p274 = scmp.eq.s32.totalorder %s273, 0
      %s276 = sadd.s32 %s275, 1
      %s277 = scalar_select %p274, %s275, %s276
      %p280 = pneg %p274
      %p281 = scmp.eq.s32.totalorder %s30, 1
      %p282 = por %p280, %p281
      %p283 = scmp.ne.s32.totalorder %s275, %s278
      %p284 = scmp.eq.s32.totalorder %s30, 0
      %p285 = por %p283, %p284
      %p286 = scmp.ne.s32.totalorder %s275, %s278
      %p287 = scmp.eq.s32.totalorder %s35, 1
      %p288 = por %p286, %p287
      %p289 = scmp.ne.s32.totalorder %s278, %s279
      %p290 = scmp.eq.s32.totalorder %s35, 0
      %p291 = por %p289, %p290
      %p292 = scmp.ne.s32.totalorder %s278, %s279
      %p293 = scmp.eq.s32.totalorder %s36, 1
      %p294 = por %p292, %p293
      %p296 = scmp.ne.s32.totalorder %s279, %s295
      %p297 = scmp.eq.s32.totalorder %s36, 0
      %p298 = por %p296, %p297
      %s299 = ssub.s32 %s38, %s52
      %s300 = ssub.s32 %s39, %s48
      %s301 = sor.u32 %s299, %s300
      %s302 = ssub.s32 %s37, %s56
      %s303 = sor.u32 %s301, %s302
      %p304 = scmp.eq.s32.totalorder %s303, 0
      %s306 = sadd.s32 %s305, 1
      %s307 = scalar_select %p304, %s305, %s306
      %p310 = pneg %p304
      %p311 = scmp.eq.s32.totalorder %s30, 1
      %p312 = por %p310, %p311
      %p313 = scmp.ne.s32.totalorder %s305, %s308
      %p314 = scmp.eq.s32.totalorder %s30, 0
      %p315 = por %p313, %p314
      %p316 = scmp.ne.s32.totalorder %s305, %s308
      %p317 = scmp.eq.s32.totalorder %s35, 1
      %p318 = por %p316, %p317
      %p319 = scmp.ne.s32.totalorder %s308, %s309
      %p320 = scmp.eq.s32.totalorder %s35, 0
      %p321 = por %p319, %p320
      %p322 = scmp.ne.s32.totalorder %s308, %s309
      %p323 = scmp.eq.s32.totalorder %s36, 1
      %p324 = por %p322, %p323
      %p326 = scmp.ne.s32.totalorder %s309, %s325
      %p327 = scmp.eq.s32.totalorder %s36, 0
      %p328 = por %p326, %p327
      %s329 = ssub.s32 %s38, %s52
      %s330 = ssub.s32 %s39, %s48
      %s331 = sor.u32 %s329, %s330
      %s332 = ssub.s32 %s37, %s56
      %s333 = sor.u32 %s331, %s332
      %p334 = scmp.eq.s32.totalorder %s333, 0
      %s336 = sadd.s32 %s335, 1
      %s337 = scalar_select %p334, %s335, %s336
      %p340 = pneg %p334
      %p341 = scmp.eq.s32.totalorder %s30, 1
      %p342 = por %p340, %p341
      %p343 = scmp.ne.s32.totalorder %s335, %s338
      %p344 = scmp.eq.s32.totalorder %s30, 0
      %p345 = por %p343, %p344
      %p346 = scmp.ne.s32.totalorder %s335, %s338
      %p347 = scmp.eq.s32.totalorder %s35, 1
      %p348 = por %p346, %p347
      %p349 = scmp.ne.s32.totalorder %s338, %s339
      %p350 = scmp.eq.s32.totalorder %s35, 0
      %p351 = por %p349, %p350
      %p352 = scmp.ne.s32.totalorder %s338, %s339
      %p353 = scmp.eq.s32.totalorder %s36, 1
      %p354 = por %p352, %p353
      %p356 = scmp.ne.s32.totalorder %s339, %s355
      %p357 = scmp.eq.s32.totalorder %s36, 0
      %p358 = por %p356, %p357
      %p359 = scmp.le.s32.totalorder 1, %s30
      %p360 = scmp.lt.s32.totalorder %s30, 3
      %p361 = pnand %p359, %p360
      %p362 = pneg %p361
      // Predicated region
      $region9: #{tpu_custom_call.1} parent=5 // pred_check
        _
      $region10: #{tpu_custom_call.1} parent=5 // pred_check_branch
        %364 = sbr.rel (%p361) target = $region12
      $region11: #{tpu_custom_call.1} parent=5 // pred_region
        %s365 = ssub.s32 %s30, 1
        // Predicated region
        $region13: #{tpu_custom_call.1} parent=11 // pred_check
          %p366 = pneg %p131
        $region14: #{tpu_custom_call.1} parent=11 // pred_check_branch
          %368 = sbr.rel (%p366) target = $region16
        $region15: #{tpu_custom_call.1} parent=11 // pred_region
          %s369 = smul.u32 4, %s40
          %s371 = ssub.s32 2048, 2048
          %372 = vsyncadd [#allocation6], %s371
          %s373 = smul.addr %s369, 128
          %s374 = scalar_lea.hbm %s2, %s373
          %s375 = sshll.u32 [#allocation7], 4
          %s376 = int_to_ptr.vmem [resolvable:$true] %s375
          %381 = dma.hbm_to_vmem [thread:$0]  %s374, 2048, %s376, [#allocation6], 512, 512, 32
        $region16: #{tpu_custom_call.1} parent=11 // pred_fallthru
          _
        // Predicated region
        $region17: #{tpu_custom_call.1} parent=11 // pred_check
          %p382 = pneg %p157
        $region18: #{tpu_custom_call.1} parent=11 // pred_check_branch
          %384 = sbr.rel (%p382) target = $region20
        $region19: #{tpu_custom_call.1} parent=11 // pred_region
          %s385 = smul.u32 4, %s40
          %p386 = scmp.lt.s32.totalorder %s385, 3
          %s387 = scalar_select %p386, %s385, 3
          %s388 = scalar_lea.vmem %s3, %s387
          %s389 = smul.u32 4, %s40
        $region20: #{tpu_custom_call.1} parent=11 // pred_fallthru
          _
        // Predicated region
        $region21: #{tpu_custom_call.1} parent=11 // pred_check
          %p390 = pneg %p183
        $region22: #{tpu_custom_call.1} parent=11 // pred_check_branch
          %392 = sbr.rel (%p390) target = $region24
        $region23: #{tpu_custom_call.1} parent=11 // pred_region
          %s393 = smul.u32 4, %s40
          %s395 = ssub.s32 2048, 2048
          %396 = vsyncadd [#allocation9], %s395
          %s397 = smul.addr %s393, 128
          %s398 = scalar_lea.hbm %s4, %s397
          %s399 = sshll.u32 [#allocation8], 4
          %s400 = int_to_ptr.vmem [resolvable:$true] %s399
          %405 = dma.hbm_to_vmem [thread:$0]  %s398, 2048, %s400, [#allocation9], 512, 512, 32
        $region24: #{tpu_custom_call.1} parent=11 // pred_fallthru
          _
        // Predicated region
        $region25: #{tpu_custom_call.1} parent=11 // pred_check
          %p406 = pneg %p209
        $region26: #{tpu_custom_call.1} parent=11 // pred_check_branch
          %408 = sbr.rel (%p406) target = $region28
        $region27: #{tpu_custom_call.1} parent=11 // pred_region
          %s409 = smul.u32 4, %s40
          %p410 = scmp.lt.s32.totalorder %s409, 3
          %s411 = scalar_select %p410, %s409, 3
          %s412 = scalar_lea.vmem %s5, %s411
          %s413 = smul.u32 4, %s40
        $region28: #{tpu_custom_call.1} parent=11 // pred_fallthru
          _
        // Predicated region
        $region29: #{tpu_custom_call.1} parent=11 // pred_check
          %p414 = pneg %p235
        $region30: #{tpu_custom_call.1} parent=11 // pred_check_branch
          %416 = sbr.rel (%p414) target = $region32
        $region31: #{tpu_custom_call.1} parent=11 // pred_region
          %s417 = smul.u32 4, %s40
          %s419 = ssub.s32 2048, 2048
          %420 = vsyncadd [#allocation9], %s419
          %s421 = smul.addr %s417, 128
          %s422 = scalar_lea.hbm %s6, %s421
          %s423 = sshll.u32 [#allocation10], 4
          %s424 = int_to_ptr.vmem [resolvable:$true] %s423
          %429 = dma.hbm_to_vmem [thread:$0]  %s422, 2048, %s424, [#allocation9], 512, 512, 32
        $region32: #{tpu_custom_call.1} parent=11 // pred_fallthru
          _
        // Predicated region
        $region33: #{tpu_custom_call.1} parent=11 // pred_check
          %p430 = pneg %p261
        $region34: #{tpu_custom_call.1} parent=11 // pred_check_branch
          %432 = sbr.rel (%p430) target = $region36
        $region35: #{tpu_custom_call.1} parent=11 // pred_region
          %s433 = smul.u32 4, %s40
          %p434 = scmp.lt.s32.totalorder %s433, 3
          %s435 = scalar_select %p434, %s433, 3
          %s436 = scalar_lea.vmem %s7, %s435
          %s437 = smul.u32 4, %s40
        $region36: #{tpu_custom_call.1} parent=11 // pred_fallthru
          _
      $region12: #{tpu_custom_call.1} parent=5 // pred_fallthru
        _
      %p438 = scmp.lt.s32.totalorder %s30, 2
      // Predicated region
      $region37: #{tpu_custom_call.1} parent=5 // pred_check
        %p439 = pneg %p438
      $region38: #{tpu_custom_call.1} parent=5 // pred_check_branch
        %441 = sbr.rel (%p439) target = $region40
      $region39: #{tpu_custom_call.1} parent=5 // pred_region
        // Predicated region
        $region41: #{tpu_custom_call.1} parent=39 // pred_check
          %p442 = pneg %p71
        $region42: #{tpu_custom_call.1} parent=39 // pred_check_branch
          %444 = sbr.rel (%p442) target = $region44
        $region43: #{tpu_custom_call.1} parent=39 // pred_region
          %s445 = sand.u32 %s61, 1
          %s446 = scalar_lea.sflag [#allocation3], %s445
          %s447 = sand.u32 %s61, 1
          %s448 = smul.addr %s447, 16
          %s449 = scalar_lea.vmem [#allocation2], %s448
          %s450 = smul.u32 2, %s39
          %s452 = ssub.s32 256, 256
          %453 = vsyncadd %s446, %s452
          %s454 = smul.addr %s38, 2
          %s455 = sadd.s32 %s450, %s454
          %s456 = smul.addr %s455, 128
          %s457 = scalar_lea.hbm %s0, %s456
          %s458 = sshll.u32 %s449, 4
          %s459 = int_to_ptr.vmem [resolvable:$true] %s458
          %464 = dma.hbm_to_vmem [thread:$0]  %s457, 256, %s459, %s446, 128, 128, 8
        $region44: #{tpu_custom_call.1} parent=39 // pred_fallthru
          _
        // Predicated region
        $region45: #{tpu_custom_call.1} parent=39 // pred_check
          %p465 = pneg %p99
        $region46: #{tpu_custom_call.1} parent=39 // pred_check_branch
          %467 = sbr.rel (%p465) target = $region48
        $region47: #{tpu_custom_call.1} parent=39 // pred_region
          %s468 = sand.u32 %s30, 1
          %s469 = scalar_lea.sflag [#allocation6], %s468
          %s470 = sand.u32 %s89, 1
          %s471 = smul.addr %s470, 16
          %s472 = scalar_lea.vmem [#allocation5], %s471
          %s473 = smul.u32 2, %s39
          %s475 = ssub.s32 256, 256
          %476 = vsyncadd %s469, %s475
          %s477 = smul.addr %s38, 2
          %s478 = sadd.s32 %s473, %s477
          %s479 = smul.addr %s478, 128
          %s480 = scalar_lea.hbm %s1, %s479
          %s481 = sshll.u32 %s472, 4
          %s482 = int_to_ptr.vmem [resolvable:$true] %s481
          %487 = dma.hbm_to_vmem [thread:$0]  %s480, 256, %s482, %s469, 128, 128, 8
        $region48: #{tpu_custom_call.1} parent=39 // pred_fallthru
          _
      $region40: #{tpu_custom_call.1} parent=5 // pred_fallthru
        _
      %p488 = scmp.le.s32.totalorder 1, %s30
      %p489 = scmp.lt.s32.totalorder %s30, 3
      %p490 = pnand %p488, %p489
      %p491 = pneg %p490
      // Predicated region
      $region49: #{tpu_custom_call.1} parent=5 // pred_check
        _
      $region50: #{tpu_custom_call.1} parent=5 // pred_check_branch
        %493 = sbr.rel (%p490) target = $region52
      $region51: #{tpu_custom_call.1} parent=5 // pred_region
        %s494 = ssub.s32 %s30, 1
        %s495 = sand.u32 %s64, 1
        %s496 = scalar_lea.sflag [#allocation3], %s495
        %s497 = sand.u32 %s64, 1
        %s498 = smul.addr %s497, 16
        %s499 = scalar_lea.vmem [#allocation2], %s498
        // Predicated region
        $region53: #{tpu_custom_call.1} parent=51 // pred_check
          %p500 = pneg %p77
        $region54: #{tpu_custom_call.1} parent=51 // pred_check_branch
          %502 = sbr.rel (%p500) target = $region56
        $region55: #{tpu_custom_call.1} parent=51 // pred_region
          %503 = dma.done %s496, 256
        $region56: #{tpu_custom_call.1} parent=51 // pred_fallthru
          _
        %s504 = sand.u32 %s35, 1
        %s505 = scalar_lea.sflag [#allocation6], %s504
        %s506 = sand.u32 %s92, 1
        %s507 = smul.addr %s506, 16
        %s508 = scalar_lea.vmem [#allocation5], %s507
        // Predicated region
        $region57: #{tpu_custom_call.1} parent=51 // pred_check
          %p509 = pneg %p105
        $region58: #{tpu_custom_call.1} parent=51 // pred_check_branch
          %511 = sbr.rel (%p509) target = $region60
        $region59: #{tpu_custom_call.1} parent=51 // pred_region
          %512 = dma.done %s505, 256
        $region60: #{tpu_custom_call.1} parent=51 // pred_fallthru
          _
        // Predicated region
        $region61: #{tpu_custom_call.1} parent=51 // pred_check
          %p513 = pneg %p131
        $region62: #{tpu_custom_call.1} parent=51 // pred_check_branch
          %515 = sbr.rel (%p513) target = $region64
        $region63: #{tpu_custom_call.1} parent=51 // pred_region
          %516 = dma.done [#allocation6], 2048
        $region64: #{tpu_custom_call.1} parent=51 // pred_fallthru
          _
        // Predicated region
        $region65: #{tpu_custom_call.1} parent=51 // pred_check
          %p517 = pneg %p183
        $region66: #{tpu_custom_call.1} parent=51 // pred_check_branch
          %519 = sbr.rel (%p517) target = $region68
        $region67: #{tpu_custom_call.1} parent=51 // pred_region
          %520 = dma.done [#allocation9], 2048
        $region68: #{tpu_custom_call.1} parent=51 // pred_fallthru
          _
        // Predicated region
        $region69: #{tpu_custom_call.1} parent=51 // pred_check
          %p521 = pneg %p235
        $region70: #{tpu_custom_call.1} parent=51 // pred_check_branch
          %523 = sbr.rel (%p521) target = $region72
        $region71: #{tpu_custom_call.1} parent=51 // pred_region
          %524 = dma.done [#allocation9], 2048
        $region72: #{tpu_custom_call.1} parent=51 // pred_fallthru
          _
        %s525 = sand.u32 %s64, 1
        %s526 = scalar_lea.sflag [#allocation3], %s525
        %s527 = sand.u32 %s64, 1
        %s528 = smul.addr %s527, 16
        %s529 = scalar_lea.vmem [#allocation2], %s528
        %p530 = pneg %p77
        %p531 = pneg %p74
        %s532 = sand.u32 %s35, 1
        %s533 = scalar_lea.sflag [#allocation6], %s532
        %s534 = sand.u32 %s92, 1
        %s535 = smul.addr %s534, 16
        %s536 = scalar_lea.vmem [#allocation5], %s535
        %p537 = pneg %p105
        %p538 = pneg %p102
        %p539 = pneg %p131
        %p540 = pneg %p128
        %s541 = smul.u32 4, %s40
        %p542 = scmp.lt.s32.totalorder %s541, 3
        %s543 = scalar_select %p542, %s541, 3
        %s544 = scalar_lea.vmem %s3, %s543
        %p545 = pneg %p157
        %p546 = pneg %p154
        %p547 = pneg %p183
        %p548 = pneg %p180
        %s549 = smul.u32 4, %s40
        %p550 = scmp.lt.s32.totalorder %s549, 3
        %s551 = scalar_select %p550, %s549, 3
        %s552 = scalar_lea.vmem %s5, %s551
        %p553 = pneg %p209
        %p554 = pneg %p206
        %p555 = pneg %p235
        %p556 = pneg %p232
        %s557 = smul.u32 4, %s40
        %p558 = scmp.lt.s32.totalorder %s557, 3
        %s559 = scalar_select %p558, %s557, 3
        %s560 = scalar_lea.vmem %s7, %s559
        %p561 = pneg %p261
        %p562 = pneg %p258
        %p563 = pneg %p291
        %p564 = pneg %p288
        %s565 = sand.u32 %s278, 1
        %s566 = scalar_lea.sflag [#allocation4], %s565
        %s567 = sand.u32 %s278, 1
        %s568 = smul.addr %s567, 64
        %s569 = scalar_lea.vmem [#allocation11], %s568
        %p570 = pneg %p321
        %p571 = pneg %p318
        %s572 = sand.u32 %s35, 1
        %s573 = scalar_lea.sflag [#allocation13], %s572
        %s574 = sand.u32 %s308, 1
        %s575 = smul.addr %s574, 64
        %s576 = scalar_lea.vmem [#allocation12], %s575
        %p577 = pneg %p351
        %p578 = pneg %p348
        %s579 = sand.u32 %s35, 1
        %s580 = scalar_lea.sflag [#allocation13], %s579
        %s581 = sand.u32 %s338, 1
        %s582 = smul.addr %s581, 64
        %s583 = scalar_lea.vmem [#allocation14], %s582
        %s584 = smul.u32 2, %s42
        %s585 = smul.u32 2, %s42
        %s586 = smul.u32 4, %s40
        %s587 = smul.u32 4, %s40
        %p588 = scmp.lt.s32.totalorder %s587, 3
        %s589 = scalar_select %p588, %s587, 3
        %s590 = scalar_lea.vmem %s3, %s589
        %s591 = smul.u32 4, %s40
        %s592 = smul.u32 4, %s40
        %s593 = smul.u32 4, %s40
        %p594 = scmp.lt.s32.totalorder %s593, 3
        %s595 = scalar_select %p594, %s593, 3
        %s596 = scalar_lea.vmem %s5, %s595
        %s597 = smul.u32 4, %s40
        %s598 = smul.u32 4, %s40
        %s599 = smul.u32 4, %s40
        %p600 = scmp.lt.s32.totalorder %s599, 3
        %s601 = scalar_select %p600, %s599, 3
        %s602 = scalar_lea.vmem %s7, %s601
        %s603 = smul.u32 4, %s40
        %s604 = smul.u32 2, %s42
        %s605 = smul.u32 4, %s40
        %s606 = smul.u32 2, %s42
        %s607 = smul.u32 4, %s40
        %s608 = smul.u32 2, %s42
        %s609 = smul.u32 4, %s40
        %v610 = vld [vmem:[%s499] sm:$0xff]
        %v611 = vld [vmem:[%s499 + $0x8] sm:$0xff]
        %v612 = vld [vmem:[%s508] sm:$0xff]
        %v613 = vld [vmem:[%s508 + $0x8] sm:$0xff]
        %v614 = vld [vmem:[#allocation7] sm:$0xff]
        %v615 = vld [vmem:[#allocation7 + $0x8] sm:$0xff]
        %v616 = vld [vmem:[#allocation7 + $0x10] sm:$0xff]
        %v617 = vld [vmem:[#allocation7 + $0x18] sm:$0xff]
        %v618 = vld [vmem:[#allocation7 + $0x20] sm:$0xff]
        %v619 = vld [vmem:[#allocation7 + $0x28] sm:$0xff]
        %v620 = vld [vmem:[#allocation7 + $0x30] sm:$0xff]
        %v621 = vld [vmem:[#allocation7 + $0x38] sm:$0xff]
        %v622 = vld [vmem:[#allocation7 + $0x40] sm:$0xff]
        %v623 = vld [vmem:[#allocation7 + $0x48] sm:$0xff]
        %v624 = vld [vmem:[#allocation7 + $0x50] sm:$0xff]
        %v625 = vld [vmem:[#allocation7 + $0x58] sm:$0xff]
        %v626 = vld [vmem:[#allocation7 + $0x60] sm:$0xff]
        %v627 = vld [vmem:[#allocation7 + $0x68] sm:$0xff]
        %v628 = vld [vmem:[#allocation7 + $0x70] sm:$0xff]
        %v629 = vld [vmem:[#allocation7 + $0x78] sm:$0xff]
        %v630 = vld [vmem:[%s590] sm:$0xf]
        %v632 = vlaneseq
        %v633 = vshrl.u32 %v632, 7
        %v634 = vsub.s32 0, %v633
        %v635 = vrot.slane %v630, %v634
        %v636 = vlaneseq
        %v637 = vshrl.u32 %v636, 7
        %v638 = vsub.s32 1, %v637
        %v639 = vrot.slane %v630, %v638
        %v640 = vlaneseq
        %v641 = vshrl.u32 %v640, 7
        %v642 = vsub.s32 2, %v641
        %v643 = vrot.slane %v630, %v642
        %v644 = vlaneseq
        %v645 = vshrl.u32 %v644, 7
        %v646 = vsub.s32 3, %v645
        %v647 = vrot.slane %v630, %v646
        %vm652 = vcmask 261120
        %v654 = vsel %vm652, %v612, 0
        %v657 = vsel %vm652, %v613, 0
        %659 = vmatprep.subr.mxu0 %v615
        %660 = vmatpush1.msra.mxu0 %v614
        %661 = vmatprep.subr.mxu0 %v619
        %662 = vmatpush1.msra.mxu0 %v618
        %663 = vmatprep.subr.mxu0 %v623
        %664 = vmatpush1.msra.mxu0 %v622
        %665 = vmatprep.subr.mxu0 %v627
        %666 = vmatpush1.msra.mxu0 %v626
        %667 = vmatprep.subr.mxu0 0.0
        %668 = vmatpush1.msra.mxu0 0.0
        %669 = vmatprep.subr.mxu0 0.0
        %670 = vmatpush1.msra.mxu0 0.0
        %671 = vmatprep.subr.mxu0 0.0
        %672 = vmatpush1.msra.mxu0 0.0
        %673 = vmatprep.subr.mxu0 0.0
        %674 = vmatpush1.msra.mxu0 0.0
        %675 = vmatprep.subr.mxu0 0.0
        %676 = vmatpush1.msra.mxu0 0.0
        %677 = vmatprep.subr.mxu0 0.0
        %678 = vmatpush1.msra.mxu0 0.0
        %679 = vmatprep.subr.mxu0 0.0
        %680 = vmatpush1.msra.mxu0 0.0
        %681 = vmatprep.subr.mxu0 0.0
        %682 = vmatpush1.msra.mxu0 0.0
        %683 = vmatprep.subr.mxu0 0.0
        %684 = vmatpush1.msra.mxu0 0.0
        %685 = vmatprep.subr.mxu0 0.0
        %686 = vmatpush1.msra.mxu0 0.0
        %687 = vmatprep.subr.mxu0 0.0
        %688 = vmatpush1.msra.mxu0 0.0
        %689 = vmatprep.subr.mxu0 0.0
        %690 = vmatpush1.msra.mxu0 0.0
        %691 = vmatprep.subr.mxu0 0.0
        %692 = vmatpush1.msra.mxu0 0.0
        %693 = vmatprep.subr.mxu0 0.0
        %694 = vmatpush1.msra.mxu0 0.0
        %695 = vmatprep.subr.mxu0 0.0
        %696 = vmatpush1.msra.mxu0 0.0
        %697 = vmatprep.subr.mxu0 0.0
        %698 = vmatpush1.msra.mxu0 0.0
        %699 = vmatprep.subr.mxu0 0.0
        %700 = vmatpush1.msra.mxu0 0.0
        %701 = vmatprep.subr.mxu0 0.0
        %702 = vmatpush1.msra.mxu0 0.0
        %703 = vmatprep.subr.mxu0 0.0
        %704 = vmatpush1.msra.mxu0 0.0
        %705 = vmatprep.subr.mxu0 0.0
        %706 = vmatpush1.msra.mxu0 0.0
        %707 = vmatprep.subr.mxu0 0.0
        %708 = vmatpush1.msra.mxu0 0.0
        %709 = vmatprep.subr.mxu0 0.0
        %710 = vmatpush1.msra.mxu0 0.0
        %711 = vmatprep.subr.mxu0 0.0
        %712 = vmatpush1.msra.mxu0 0.0
        %713 = vmatprep.subr.mxu0 0.0
        %714 = vmatpush1.msra.mxu0 0.0
        %715 = vmatprep.subr.mxu0 0.0
        %716 = vmatpush1.msra.mxu0 0.0
        %717 = vmatprep.subr.mxu0 0.0
        %718 = vmatpush1.msra.mxu0 0.0
        %719 = vmatprep.subr.mxu0 0.0
        %720 = vmatpush1.msra.mxu0 0.0
        %721 = vmatprep.subr.mxu0 0.0
        %722 = vmatpush1.msra.mxu0 0.0
        %723 = vmatprep.mubr.f32.mxu0 0.0
        %724 = vmatmul.mubr.f32.gmra.mrb[0].mxu0 %v654
        %v725 = vpop.f32.mrb[0].mxu0
        %v726 = vadd.f32 %v635, %v725
        %v727 = vpop.f32.mrb[0].mxu0
        %v728 = vadd.f32 %v639, %v727
        %729 = vmatprep.mubr.f32.mxu0 0.0
        %730 = vmatmul.mubr.f32.gmra.mrb[0].mxu0 %v657
        %v731 = vpop.f32.mrb[0].mxu0
        %v732 = vadd.f32 %v635, %v731
        %v733 = vpop.f32.mrb[0].mxu0
        %v734 = vadd.f32 %v639, %v733
        %735 = vdwg.mxu0
        %736 = vmatprep.subr.mxu0 %v617
        %737 = vmatpush1.msra.mxu0 %v616
        %738 = vmatprep.subr.mxu0 %v621
        %739 = vmatpush1.msra.mxu0 %v620
        %740 = vmatprep.subr.mxu0 %v625
        %741 = vmatpush1.msra.mxu0 %v624
        %742 = vmatprep.subr.mxu0 %v629
        %743 = vmatpush1.msra.mxu0 %v628
        %744 = vmatprep.subr.mxu0 0.0
        %745 = vmatpush1.msra.mxu0 0.0
        %746 = vmatprep.subr.mxu0 0.0
        %747 = vmatpush1.msra.mxu0 0.0
        %748 = vmatprep.subr.mxu0 0.0
        %749 = vmatpush1.msra.mxu0 0.0
        %750 = vmatprep.subr.mxu0 0.0
        %751 = vmatpush1.msra.mxu0 0.0
        %752 = vmatprep.subr.mxu0 0.0
        %753 = vmatpush1.msra.mxu0 0.0
        %754 = vmatprep.subr.mxu0 0.0
        %755 = vmatpush1.msra.mxu0 0.0
        %756 = vmatprep.subr.mxu0 0.0
        %757 = vmatpush1.msra.mxu0 0.0
        %758 = vmatprep.subr.mxu0 0.0
        %759 = vmatpush1.msra.mxu0 0.0
        %760 = vmatprep.subr.mxu0 0.0
        %761 = vmatpush1.msra.mxu0 0.0
        %762 = vmatprep.subr.mxu0 0.0
        %763 = vmatpush1.msra.mxu0 0.0
        %764 = vmatprep.subr.mxu0 0.0
        %765 = vmatpush1.msra.mxu0 0.0
        %766 = vmatprep.subr.mxu0 0.0
        %767 = vmatpush1.msra.mxu0 0.0
        %768 = vmatprep.subr.mxu0 0.0
        %769 = vmatpush1.msra.mxu0 0.0
        %770 = vmatprep.subr.mxu0 0.0
        %771 = vmatpush1.msra.mxu0 0.0
        %772 = vmatprep.subr.mxu0 0.0
        %773 = vmatpush1.msra.mxu0 0.0
        %774 = vmatprep.subr.mxu0 0.0
        %775 = vmatpush1.msra.mxu0 0.0
        %776 = vmatprep.subr.mxu0 0.0
        %777 = vmatpush1.msra.mxu0 0.0
        %778 = vmatprep.subr.mxu0 0.0
        %779 = vmatpush1.msra.mxu0 0.0
        %780 = vmatprep.subr.mxu0 0.0
        %781 = vmatpush1.msra.mxu0 0.0
        %782 = vmatprep.subr.mxu0 0.0
        %783 = vmatpush1.msra.mxu0 0.0
        %784 = vmatprep.subr.mxu0 0.0
        %785 = vmatpush1.msra.mxu0 0.0
        %786 = vmatprep.subr.mxu0 0.0
        %787 = vmatpush1.msra.mxu0 0.0
        %788 = vmatprep.subr.mxu0 0.0
        %789 = vmatpush1.msra.mxu0 0.0
        %790 = vmatprep.subr.mxu0 0.0
        %791 = vmatpush1.msra.mxu0 0.0
        %792 = vmatprep.subr.mxu0 0.0
        %793 = vmatpush1.msra.mxu0 0.0
        %794 = vmatprep.subr.mxu0 0.0
        %795 = vmatpush1.msra.mxu0 0.0
        %796 = vmatprep.subr.mxu0 0.0
        %797 = vmatpush1.msra.mxu0 0.0
        %798 = vmatprep.subr.mxu0 0.0
        %799 = vmatpush1.msra.mxu0 0.0
        %800 = vmatprep.mubr.f32.mxu0 0.0
        %801 = vmatmul.mubr.f32.gmra.mrb[0].mxu0 %v654
        %v802 = vpop.f32.mrb[0].mxu0
        %v803 = vadd.f32 %v643, %v802
        %v804 = vpop.f32.mrb[0].mxu0
        %v805 = vadd.f32 %v647, %v804
        %806 = vmatprep.mubr.f32.mxu0 0.0
        %807 = vmatmul.mubr.f32.gmra.mrb[0].mxu0 %v657
        %v808 = vpop.f32.mrb[0].mxu0
        %v809 = vadd.f32 %v643, %v808
        %v810 = vpop.f32.mrb[0].mxu0
        %v811 = vadd.f32 %v647, %v810
        %812 = vdwg.mxu0
        %813 = vst [vmem:[%s569] sm:$0xff] %v726
        %814 = vst [vmem:[%s569 + $0x8] sm:$0xff] %v728
        %815 = vst [vmem:[%s569 + $0x10] sm:$0xff] %v803
        %816 = vst [vmem:[%s569 + $0x18] sm:$0xff] %v805
        %817 = vst [vmem:[%s569 + $0x20] sm:$0xff] %v732
        %818 = vst [vmem:[%s569 + $0x28] sm:$0xff] %v734
        %819 = vst [vmem:[%s569 + $0x30] sm:$0xff] %v809
        %820 = vst [vmem:[%s569 + $0x38] sm:$0xff] %v811
        %v821 = vld [vmem:[#allocation8] sm:$0xff]
        %v822 = vld [vmem:[#allocation8 + $0x8] sm:$0xff]
        %v823 = vld [vmem:[#allocation8 + $0x10] sm:$0xff]
        %v824 = vld [vmem:[#allocation8 + $0x18] sm:$0xff]
        %v825 = vld [vmem:[#allocation8 + $0x20] sm:$0xff]
        %v826 = vld [vmem:[#allocation8 + $0x28] sm:$0xff]
        %v827 = vld [vmem:[#allocation8 + $0x30] sm:$0xff]
        %v828 = vld [vmem:[#allocation8 + $0x38] sm:$0xff]
        %v829 = vld [vmem:[#allocation8 + $0x40] sm:$0xff]
        %v830 = vld [vmem:[#allocation8 + $0x48] sm:$0xff]
        %v831 = vld [vmem:[#allocation8 + $0x50] sm:$0xff]
        %v832 = vld [vmem:[#allocation8 + $0x58] sm:$0xff]
        %v833 = vld [vmem:[#allocation8 + $0x60] sm:$0xff]
        %v834 = vld [vmem:[#allocation8 + $0x68] sm:$0xff]
        %v835 = vld [vmem:[#allocation8 + $0x70] sm:$0xff]
        %v836 = vld [vmem:[#allocation8 + $0x78] sm:$0xff]
        %v837 = vld [vmem:[%s596] sm:$0xf]
        %v839 = vlaneseq
        %v840 = vshrl.u32 %v839, 7
        %v841 = vsub.s32 0, %v840
        %v842 = vrot.slane %v837, %v841
        %v843 = vlaneseq
        %v844 = vshrl.u32 %v843, 7
        %v845 = vsub.s32 1, %v844
        %v846 = vrot.slane %v837, %v845
        %v847 = vlaneseq
        %v848 = vshrl.u32 %v847, 7
        %v849 = vsub.s32 2, %v848
        %v850 = vrot.slane %v837, %v849
        %v851 = vlaneseq
        %v852 = vshrl.u32 %v851, 7
        %v853 = vsub.s32 3, %v852
        %v854 = vrot.slane %v837, %v853
        %v860 = vsel %vm652, %v610, 0
        %v863 = vsel %vm652, %v611, 0
        %865 = vmatprep.subr.mxu0 %v822
        %866 = vmatpush1.msra.mxu0 %v821
        %867 = vmatprep.subr.mxu0 %v826
        %868 = vmatpush1.msra.mxu0 %v825
        %869 = vmatprep.subr.mxu0 %v830
        %870 = vmatpush1.msra.mxu0 %v829
        %871 = vmatprep.subr.mxu0 %v834
        %872 = vmatpush1.msra.mxu0 %v833
        %873 = vmatprep.subr.mxu0 0.0
        %874 = vmatpush1.msra.mxu0 0.0
        %875 = vmatprep.subr.mxu0 0.0
        %876 = vmatpush1.msra.mxu0 0.0
        %877 = vmatprep.subr.mxu0 0.0
        %878 = vmatpush1.msra.mxu0 0.0
        %879 = vmatprep.subr.mxu0 0.0
        %880 = vmatpush1.msra.mxu0 0.0
        %881 = vmatprep.subr.mxu0 0.0
        %882 = vmatpush1.msra.mxu0 0.0
        %883 = vmatprep.subr.mxu0 0.0
        %884 = vmatpush1.msra.mxu0 0.0
        %885 = vmatprep.subr.mxu0 0.0
        %886 = vmatpush1.msra.mxu0 0.0
        %887 = vmatprep.subr.mxu0 0.0
        %888 = vmatpush1.msra.mxu0 0.0
        %889 = vmatprep.subr.mxu0 0.0
        %890 = vmatpush1.msra.mxu0 0.0
        %891 = vmatprep.subr.mxu0 0.0
        %892 = vmatpush1.msra.mxu0 0.0
        %893 = vmatprep.subr.mxu0 0.0
        %894 = vmatpush1.msra.mxu0 0.0
        %895 = vmatprep.subr.mxu0 0.0
        %896 = vmatpush1.msra.mxu0 0.0
        %897 = vmatprep.subr.mxu0 0.0
        %898 = vmatpush1.msra.mxu0 0.0
        %899 = vmatprep.subr.mxu0 0.0
        %900 = vmatpush1.msra.mxu0 0.0
        %901 = vmatprep.subr.mxu0 0.0
        %902 = vmatpush1.msra.mxu0 0.0
        %903 = vmatprep.subr.mxu0 0.0
        %904 = vmatpush1.msra.mxu0 0.0
        %905 = vmatprep.subr.mxu0 0.0
        %906 = vmatpush1.msra.mxu0 0.0
        %907 = vmatprep.subr.mxu0 0.0
        %908 = vmatpush1.msra.mxu0 0.0
        %909 = vmatprep.subr.mxu0 0.0
        %910 = vmatpush1.msra.mxu0 0.0
        %911 = vmatprep.subr.mxu0 0.0
        %912 = vmatpush1.msra.mxu0 0.0
        %913 = vmatprep.subr.mxu0 0.0
        %914 = vmatpush1.msra.mxu0 0.0
        %915 = vmatprep.subr.mxu0 0.0
        %916 = vmatpush1.msra.mxu0 0.0
        %917 = vmatprep.subr.mxu0 0.0
        %918 = vmatpush1.msra.mxu0 0.0
        %919 = vmatprep.subr.mxu0 0.0
        %920 = vmatpush1.msra.mxu0 0.0
        %921 = vmatprep.subr.mxu0 0.0
        %922 = vmatpush1.msra.mxu0 0.0
        %923 = vmatprep.subr.mxu0 0.0
        %924 = vmatpush1.msra.mxu0 0.0
        %925 = vmatprep.subr.mxu0 0.0
        %926 = vmatpush1.msra.mxu0 0.0
        %927 = vmatprep.subr.mxu0 0.0
        %928 = vmatpush1.msra.mxu0 0.0
        %929 = vmatprep.mubr.f32.mxu0 0.0
        %930 = vmatmul.mubr.f32.gmra.mrb[0].mxu0 %v860
        %v931 = vpop.f32.mrb[0].mxu0
        %v932 = vadd.f32 %v842, %v931
        %v933 = vpop.f32.mrb[0].mxu0
        %v934 = vadd.f32 %v846, %v933
        %935 = vmatprep.mubr.f32.mxu0 0.0
        %936 = vmatmul.mubr.f32.gmra.mrb[0].mxu0 %v863
        %v937 = vpop.f32.mrb[0].mxu0
        %v938 = vadd.f32 %v842, %v937
        %v939 = vpop.f32.mrb[0].mxu0
        %v940 = vadd.f32 %v846, %v939
        %941 = vdwg.mxu0
        %942 = vmatprep.subr.mxu0 %v824
        %943 = vmatpush1.msra.mxu0 %v823
        %944 = vmatprep.subr.mxu0 %v828
        %945 = vmatpush1.msra.mxu0 %v827
        %946 = vmatprep.subr.mxu0 %v832
        %947 = vmatpush1.msra.mxu0 %v831
        %948 = vmatprep.subr.mxu0 %v836
        %949 = vmatpush1.msra.mxu0 %v835
        %950 = vmatprep.subr.mxu0 0.0
        %951 = vmatpush1.msra.mxu0 0.0
        %952 = vmatprep.subr.mxu0 0.0
        %953 = vmatpush1.msra.mxu0 0.0
        %954 = vmatprep.subr.mxu0 0.0
        %955 = vmatpush1.msra.mxu0 0.0
        %956 = vmatprep.subr.mxu0 0.0
        %957 = vmatpush1.msra.mxu0 0.0
        %958 = vmatprep.subr.mxu0 0.0
        %959 = vmatpush1.msra.mxu0 0.0
        %960 = vmatprep.subr.mxu0 0.0
        %961 = vmatpush1.msra.mxu0 0.0
        %962 = vmatprep.subr.mxu0 0.0
        %963 = vmatpush1.msra.mxu0 0.0
        %964 = vmatprep.subr.mxu0 0.0
        %965 = vmatpush1.msra.mxu0 0.0
        %966 = vmatprep.subr.mxu0 0.0
        %967 = vmatpush1.msra.mxu0 0.0
        %968 = vmatprep.subr.mxu0 0.0
        %969 = vmatpush1.msra.mxu0 0.0
        %970 = vmatprep.subr.mxu0 0.0
        %971 = vmatpush1.msra.mxu0 0.0
        %972 = vmatprep.subr.mxu0 0.0
        %973 = vmatpush1.msra.mxu0 0.0
        %974 = vmatprep.subr.mxu0 0.0
        %975 = vmatpush1.msra.mxu0 0.0
        %976 = vmatprep.subr.mxu0 0.0
        %977 = vmatpush1.msra.mxu0 0.0
        %978 = vmatprep.subr.mxu0 0.0
        %979 = vmatpush1.msra.mxu0 0.0
        %980 = vmatprep.subr.mxu0 0.0
        %981 = vmatpush1.msra.mxu0 0.0
        %982 = vmatprep.subr.mxu0 0.0
        %983 = vmatpush1.msra.mxu0 0.0
        %984 = vmatprep.subr.mxu0 0.0
        %985 = vmatpush1.msra.mxu0 0.0
        %986 = vmatprep.subr.mxu0 0.0
        %987 = vmatpush1.msra.mxu0 0.0
        %988 = vmatprep.subr.mxu0 0.0
        %989 = vmatpush1.msra.mxu0 0.0
        %990 = vmatprep.subr.mxu0 0.0
        %991 = vmatpush1.msra.mxu0 0.0
        %992 = vmatprep.subr.mxu0 0.0
        %993 = vmatpush1.msra.mxu0 0.0
        %994 = vmatprep.subr.mxu0 0.0
        %995 = vmatpush1.msra.mxu0 0.0
        %996 = vmatprep.subr.mxu0 0.0
        %997 = vmatpush1.msra.mxu0 0.0
        %998 = vmatprep.subr.mxu0 0.0
        %999 = vmatpush1.msra.mxu0 0.0
        %1000 = vmatprep.subr.mxu0 0.0
        %1001 = vmatpush1.msra.mxu0 0.0
        %1002 = vmatprep.subr.mxu0 0.0
        %1003 = vmatpush1.msra.mxu0 0.0
        %1004 = vmatprep.subr.mxu0 0.0
        %1005 = vmatpush1.msra.mxu0 0.0
        %1006 = vmatprep.mubr.f32.mxu0 0.0
        %1007 = vmatmul.mubr.f32.gmra.mrb[0].mxu0 %v860
        %v1008 = vpop.f32.mrb[0].mxu0
        %v1009 = vadd.f32 %v850, %v1008
        %v1010 = vpop.f32.mrb[0].mxu0
        %v1011 = vadd.f32 %v854, %v1010
        %1012 = vmatprep.mubr.f32.mxu0 0.0
        %1013 = vmatmul.mubr.f32.gmra.mrb[0].mxu0 %v863
        %v1014 = vpop.f32.mrb[0].mxu0
        %v1015 = vadd.f32 %v850, %v1014
        %v1016 = vpop.f32.mrb[0].mxu0
        %v1017 = vadd.f32 %v854, %v1016
        %1018 = vdwg.mxu0
        %1019 = vst [vmem:[%s576] sm:$0xff] %v932
        %1020 = vst [vmem:[%s576 + $0x8] sm:$0xff] %v934
        %1021 = vst [vmem:[%s576 + $0x10] sm:$0xff] %v1009
        %1022 = vst [vmem:[%s576 + $0x18] sm:$0xff] %v1011
        %1023 = vst [vmem:[%s576 + $0x20] sm:$0xff] %v938
        %1024 = vst [vmem:[%s576 + $0x28] sm:$0xff] %v940
        %1025 = vst [vmem:[%s576 + $0x30] sm:$0xff] %v1015
        %1026 = vst [vmem:[%s576 + $0x38] sm:$0xff] %v1017
        %v1027 = vld [vmem:[#allocation10] sm:$0xff]
        %v1028 = vld [vmem:[#allocation10 + $0x8] sm:$0xff]
        %v1029 = vld [vmem:[#allocation10 + $0x10] sm:$0xff]
        %v1030 = vld [vmem:[#allocation10 + $0x18] sm:$0xff]
        %v1031 = vld [vmem:[#allocation10 + $0x20] sm:$0xff]
        %v1032 = vld [vmem:[#allocation10 + $0x28] sm:$0xff]
        %v1033 = vld [vmem:[#allocation10 + $0x30] sm:$0xff]
        %v1034 = vld [vmem:[#allocation10 + $0x38] sm:$0xff]
        %v1035 = vld [vmem:[#allocation10 + $0x40] sm:$0xff]
        %v1036 = vld [vmem:[#allocation10 + $0x48] sm:$0xff]
        %v1037 = vld [vmem:[#allocation10 + $0x50] sm:$0xff]
        %v1038 = vld [vmem:[#allocation10 + $0x58] sm:$0xff]
        %v1039 = vld [vmem:[#allocation10 + $0x60] sm:$0xff]
        %v1040 = vld [vmem:[#allocation10 + $0x68] sm:$0xff]
        %v1041 = vld [vmem:[#allocation10 + $0x70] sm:$0xff]
        %v1042 = vld [vmem:[#allocation10 + $0x78] sm:$0xff]
        %v1043 = vld [vmem:[%s602] sm:$0xf]
        %v1045 = vlaneseq
        %v1046 = vshrl.u32 %v1045, 7
        %v1047 = vsub.s32 0, %v1046
        %v1048 = vrot.slane %v1043, %v1047
        %v1049 = vlaneseq
        %v1050 = vshrl.u32 %v1049, 7
        %v1051 = vsub.s32 1, %v1050
        %v1052 = vrot.slane %v1043, %v1051
        %v1053 = vlaneseq
        %v1054 = vshrl.u32 %v1053, 7
        %v1055 = vsub.s32 2, %v1054
        %v1056 = vrot.slane %v1043, %v1055
        %v1057 = vlaneseq
        %v1058 = vshrl.u32 %v1057, 7
        %v1059 = vsub.s32 3, %v1058
        %v1060 = vrot.slane %v1043, %v1059
        %1065 = vmatprep.subr.mxu0 %v1028
        %1066 = vmatpush1.msra.mxu0 %v1027
        %1067 = vmatprep.subr.mxu0 %v1032
        %1068 = vmatpush1.msra.mxu0 %v1031
        %1069 = vmatprep.subr.mxu0 %v1036
        %1070 = vmatpush1.msra.mxu0 %v1035
        %1071 = vmatprep.subr.mxu0 %v1040
        %1072 = vmatpush1.msra.mxu0 %v1039
        %1073 = vmatprep.subr.mxu0 0.0
        %1074 = vmatpush1.msra.mxu0 0.0
        %1075 = vmatprep.subr.mxu0 0.0
        %1076 = vmatpush1.msra.mxu0 0.0
        %1077 = vmatprep.subr.mxu0 0.0
        %1078 = vmatpush1.msra.mxu0 0.0
        %1079 = vmatprep.subr.mxu0 0.0
        %1080 = vmatpush1.msra.mxu0 0.0
        %1081 = vmatprep.subr.mxu0 0.0
        %1082 = vmatpush1.msra.mxu0 0.0
        %1083 = vmatprep.subr.mxu0 0.0
        %1084 = vmatpush1.msra.mxu0 0.0
        %1085 = vmatprep.subr.mxu0 0.0
        %1086 = vmatpush1.msra.mxu0 0.0
        %1087 = vmatprep.subr.mxu0 0.0
        %1088 = vmatpush1.msra.mxu0 0.0
        %1089 = vmatprep.subr.mxu0 0.0
        %1090 = vmatpush1.msra.mxu0 0.0
        %1091 = vmatprep.subr.mxu0 0.0
        %1092 = vmatpush1.msra.mxu0 0.0
        %1093 = vmatprep.subr.mxu0 0.0
        %1094 = vmatpush1.msra.mxu0 0.0
        %1095 = vmatprep.subr.mxu0 0.0
        %1096 = vmatpush1.msra.mxu0 0.0
        %1097 = vmatprep.subr.mxu0 0.0
        %1098 = vmatpush1.msra.mxu0 0.0
        %1099 = vmatprep.subr.mxu0 0.0
        %1100 = vmatpush1.msra.mxu0 0.0
        %1101 = vmatprep.subr.mxu0 0.0
        %1102 = vmatpush1.msra.mxu0 0.0
        %1103 = vmatprep.subr.mxu0 0.0
        %1104 = vmatpush1.msra.mxu0 0.0
        %1105 = vmatprep.subr.mxu0 0.0
        %1106 = vmatpush1.msra.mxu0 0.0
        %1107 = vmatprep.subr.mxu0 0.0
        %1108 = vmatpush1.msra.mxu0 0.0
        %1109 = vmatprep.subr.mxu0 0.0
        %1110 = vmatpush1.msra.mxu0 0.0
        %1111 = vmatprep.subr.mxu0 0.0
        %1112 = vmatpush1.msra.mxu0 0.0
        %1113 = vmatprep.subr.mxu0 0.0
        %1114 = vmatpush1.msra.mxu0 0.0
        %1115 = vmatprep.subr.mxu0 0.0
        %1116 = vmatpush1.msra.mxu0 0.0
        %1117 = vmatprep.subr.mxu0 0.0
        %1118 = vmatpush1.msra.mxu0 0.0
        %1119 = vmatprep.subr.mxu0 0.0
        %1120 = vmatpush1.msra.mxu0 0.0
        %1121 = vmatprep.subr.mxu0 0.0
        %1122 = vmatpush1.msra.mxu0 0.0
        %1123 = vmatprep.subr.mxu0 0.0
        %1124 = vmatpush1.msra.mxu0 0.0
        %1125 = vmatprep.subr.mxu0 0.0
        %1126 = vmatpush1.msra.mxu0 0.0
        %1127 = vmatprep.subr.mxu0 0.0
        %1128 = vmatpush1.msra.mxu0 0.0
        %1129 = vmatprep.mubr.f32.mxu0 0.0
        %1130 = vmatmul.mubr.f32.gmra.mrb[0].mxu0 %v860
        %v1131 = vpop.f32.mrb[0].mxu0
        %v1132 = vadd.f32 %v1048, %v1131
        %v1133 = vpop.f32.mrb[0].mxu0
        %v1134 = vadd.f32 %v1052, %v1133
        %1135 = vmatprep.mubr.f32.mxu0 0.0
        %1136 = vmatmul.mubr.f32.gmra.mrb[0].mxu0 %v863
        %v1137 = vpop.f32.mrb[0].mxu0
        %v1138 = vadd.f32 %v1048, %v1137
        %v1139 = vpop.f32.mrb[0].mxu0
        %v1140 = vadd.f32 %v1052, %v1139
        %1141 = vdwg.mxu0
        %1142 = vmatprep.subr.mxu0 %v1030
        %1143 = vmatpush1.msra.mxu0 %v1029
        %1144 = vmatprep.subr.mxu0 %v1034
        %1145 = vmatpush1.msra.mxu0 %v1033
        %1146 = vmatprep.subr.mxu0 %v1038
        %1147 = vmatpush1.msra.mxu0 %v1037
        %1148 = vmatprep.subr.mxu0 %v1042
        %1149 = vmatpush1.msra.mxu0 %v1041
        %1150 = vmatprep.subr.mxu0 0.0
        %1151 = vmatpush1.msra.mxu0 0.0
        %1152 = vmatprep.subr.mxu0 0.0
        %1153 = vmatpush1.msra.mxu0 0.0
        %1154 = vmatprep.subr.mxu0 0.0
        %1155 = vmatpush1.msra.mxu0 0.0
        %1156 = vmatprep.subr.mxu0 0.0
        %1157 = vmatpush1.msra.mxu0 0.0
        %1158 = vmatprep.subr.mxu0 0.0
        %1159 = vmatpush1.msra.mxu0 0.0
        %1160 = vmatprep.subr.mxu0 0.0
        %1161 = vmatpush1.msra.mxu0 0.0
        %1162 = vmatprep.subr.mxu0 0.0
        %1163 = vmatpush1.msra.mxu0 0.0
        %1164 = vmatprep.subr.mxu0 0.0
        %1165 = vmatpush1.msra.mxu0 0.0
        %1166 = vmatprep.subr.mxu0 0.0
        %1167 = vmatpush1.msra.mxu0 0.0
        %1168 = vmatprep.subr.mxu0 0.0
        %1169 = vmatpush1.msra.mxu0 0.0
        %1170 = vmatprep.subr.mxu0 0.0
        %1171 = vmatpush1.msra.mxu0 0.0
        %1172 = vmatprep.subr.mxu0 0.0
        %1173 = vmatpush1.msra.mxu0 0.0
        %1174 = vmatprep.subr.mxu0 0.0
        %1175 = vmatpush1.msra.mxu0 0.0
        %1176 = vmatprep.subr.mxu0 0.0
        %1177 = vmatpush1.msra.mxu0 0.0
        %1178 = vmatprep.subr.mxu0 0.0
        %1179 = vmatpush1.msra.mxu0 0.0
        %1180 = vmatprep.subr.mxu0 0.0
        %1181 = vmatpush1.msra.mxu0 0.0
        %1182 = vmatprep.subr.mxu0 0.0
        %1183 = vmatpush1.msra.mxu0 0.0
        %1184 = vmatprep.subr.mxu0 0.0
        %1185 = vmatpush1.msra.mxu0 0.0
        %1186 = vmatprep.subr.mxu0 0.0
        %1187 = vmatpush1.msra.mxu0 0.0
        %1188 = vmatprep.subr.mxu0 0.0
        %1189 = vmatpush1.msra.mxu0 0.0
        %1190 = vmatprep.subr.mxu0 0.0
        %1191 = vmatpush1.msra.mxu0 0.0
        %1192 = vmatprep.subr.mxu0 0.0
        %1193 = vmatpush1.msra.mxu0 0.0
        %1194 = vmatprep.subr.mxu0 0.0
        %1195 = vmatpush1.msra.mxu0 0.0
        %1196 = vmatprep.subr.mxu0 0.0
        %1197 = vmatpush1.msra.mxu0 0.0
        %1198 = vmatprep.subr.mxu0 0.0
        %1199 = vmatpush1.msra.mxu0 0.0
        %1200 = vmatprep.subr.mxu0 0.0
        %1201 = vmatpush1.msra.mxu0 0.0
        %1202 = vmatprep.subr.mxu0 0.0
        %1203 = vmatpush1.msra.mxu0 0.0
        %1204 = vmatprep.subr.mxu0 0.0
        %1205 = vmatpush1.msra.mxu0 0.0
        %1206 = vmatprep.mubr.f32.mxu0 0.0
        %1207 = vmatmul.mubr.f32.gmra.mrb[0].mxu0 %v860
        %v1208 = vpop.f32.mrb[0].mxu0
        %v1209 = vadd.f32 %v1056, %v1208
        %v1210 = vpop.f32.mrb[0].mxu0
        %v1211 = vadd.f32 %v1060, %v1210
        %1212 = vmatprep.mubr.f32.mxu0 0.0
        %1213 = vmatmul.mubr.f32.gmra.mrb[0].mxu0 %v863
        %v1214 = vpop.f32.mrb[0].mxu0
        %v1215 = vadd.f32 %v1056, %v1214
        %v1216 = vpop.f32.mrb[0].mxu0
        %v1217 = vadd.f32 %v1060, %v1216
        %1218 = vdwg.mxu0
        %1219 = vst [vmem:[%s583] sm:$0xff] %v1132
        %1220 = vst [vmem:[%s583 + $0x8] sm:$0xff] %v1134
        %1221 = vst [vmem:[%s583 + $0x10] sm:$0xff] %v1209
        %1222 = vst [vmem:[%s583 + $0x18] sm:$0xff] %v1211
        %1223 = vst [vmem:[%s583 + $0x20] sm:$0xff] %v1138
        %1224 = vst [vmem:[%s583 + $0x28] sm:$0xff] %v1140
        %1225 = vst [vmem:[%s583 + $0x30] sm:$0xff] %v1215
        %1226 = vst [vmem:[%s583 + $0x38] sm:$0xff] %v1217
        %s1227 = sand.u32 %s278, 1
        %s1228 = scalar_lea.sflag [#allocation4], %s1227
        %s1229 = sand.u32 %s278, 1
        %s1230 = smul.addr %s1229, 64
        %s1231 = scalar_lea.vmem [#allocation11], %s1230
        %s1232 = sand.u32 %s35, 1
        %s1233 = scalar_lea.sflag [#allocation13], %s1232
        %s1234 = sand.u32 %s308, 1
        %s1235 = smul.addr %s1234, 64
        %s1236 = scalar_lea.vmem [#allocation12], %s1235
        %s1237 = sand.u32 %s35, 1
        %s1238 = scalar_lea.sflag [#allocation13], %s1237
        %s1239 = sand.u32 %s338, 1
        %s1240 = smul.addr %s1239, 64
        %s1241 = scalar_lea.vmem [#allocation14], %s1240
        // Predicated region
        $region73: #{tpu_custom_call.1} parent=51 // pred_check
          %p1242 = pneg %p288
        $region74: #{tpu_custom_call.1} parent=51 // pred_check_branch
          %1244 = sbr.rel (%p1242) target = $region76
        $region75: #{tpu_custom_call.1} parent=51 // pred_region
          %s1245 = smul.u32 2, %s42
          %s1246 = smul.u32 4, %s40
          %s1248 = ssub.s32 1024, 1024
          %1249 = vsyncadd %s1228, %s1248
          %s1250 = smul.addr %s1245, 4
          %s1251 = sadd.s32 %s1246, %s1250
          %s1252 = smul.addr %s41, 8
          %s1253 = sadd.s32 %s1251, %s1252
          %s1254 = smul.addr %s1253, 128
          %s1255 = scalar_lea.hbm %s8, %s1254
          %s1256 = sshll.u32 %s1231, 4
          %s1257 = int_to_ptr.vmem [resolvable:$true] %s1256
          %1262 = dma.vmem_to_hbm [thread:$0]  %s1257, 1024, %s1255, %s1228, 512, 512, 32
        $region76: #{tpu_custom_call.1} parent=51 // pred_fallthru
          _
        // Predicated region
        $region77: #{tpu_custom_call.1} parent=51 // pred_check
          %p1263 = pneg %p318
        $region78: #{tpu_custom_call.1} parent=51 // pred_check_branch
          %1265 = sbr.rel (%p1263) target = $region80
        $region79: #{tpu_custom_call.1} parent=51 // pred_region
          %s1266 = smul.u32 2, %s42
          %s1267 = smul.u32 4, %s40
          %s1269 = ssub.s32 1024, 1024
          %1270 = vsyncadd %s1233, %s1269
          %s1271 = smul.addr %s1266, 4
          %s1272 = sadd.s32 %s1267, %s1271
          %s1273 = smul.addr %s41, 8
          %s1274 = sadd.s32 %s1272, %s1273
          %s1275 = smul.addr %s1274, 128
          %s1276 = scalar_lea.hbm %s9, %s1275
          %s1277 = sshll.u32 %s1236, 4
          %s1278 = int_to_ptr.vmem [resolvable:$true] %s1277
          %1283 = dma.vmem_to_hbm [thread:$0]  %s1278, 1024, %s1276, %s1233, 512, 512, 32
        $region80: #{tpu_custom_call.1} parent=51 // pred_fallthru
          _
        // Predicated region
        $region81: #{tpu_custom_call.1} parent=51 // pred_check
          %p1284 = pneg %p348
        $region82: #{tpu_custom_call.1} parent=51 // pred_check_branch
          %1286 = sbr.rel (%p1284) target = $region84
        $region83: #{tpu_custom_call.1} parent=51 // pred_region
          %s1287 = smul.u32 2, %s42
          %s1288 = smul.u32 4, %s40
          %s1290 = ssub.s32 1024, 1024
          %1291 = vsyncadd %s1238, %s1290
          %s1292 = smul.addr %s1287, 4
          %s1293 = sadd.s32 %s1288, %s1292
          %s1294 = smul.addr %s41, 8
          %s1295 = sadd.s32 %s1293, %s1294
          %s1296 = smul.addr %s1295, 128
          %s1297 = scalar_lea.hbm %s10, %s1296
          %s1298 = sshll.u32 %s1241, 4
          %s1299 = int_to_ptr.vmem [resolvable:$true] %s1298
          %1304 = dma.vmem_to_hbm [thread:$0]  %s1299, 1024, %s1297, %s1238, 512, 512, 32
        $region84: #{tpu_custom_call.1} parent=51 // pred_fallthru
          _
      $region52: #{tpu_custom_call.1} parent=5 // pred_fallthru
        _
      %p1305 = scmp.le.s32.totalorder 2, %s30
      // Predicated region
      $region85: #{tpu_custom_call.1} parent=5 // pred_check
        %p1306 = pneg %p1305
      $region86: #{tpu_custom_call.1} parent=5 // pred_check_branch
        %1308 = sbr.rel (%p1306) target = $region88
      $region87: #{tpu_custom_call.1} parent=5 // pred_region
        %s1309 = ssub.s32 %s30, 2
        // Predicated region
        $region89: #{tpu_custom_call.1} parent=87 // pred_check
          %p1310 = pneg %p294
        $region90: #{tpu_custom_call.1} parent=87 // pred_check_branch
          %1312 = sbr.rel (%p1310) target = $region92
        $region91: #{tpu_custom_call.1} parent=87 // pred_region
          %s1313 = sand.u32 %s279, 1
          %s1314 = scalar_lea.sflag [#allocation4], %s1313
          %s1315 = sand.u32 %s279, 1
          %s1316 = smul.addr %s1315, 64
          %s1317 = scalar_lea.vmem [#allocation11], %s1316
          %1318 = dma.done %s1314, 1024
        $region92: #{tpu_custom_call.1} parent=87 // pred_fallthru
          _
        // Predicated region
        $region93: #{tpu_custom_call.1} parent=87 // pred_check
          %p1319 = pneg %p324
        $region94: #{tpu_custom_call.1} parent=87 // pred_check_branch
          %1321 = sbr.rel (%p1319) target = $region96
        $region95: #{tpu_custom_call.1} parent=87 // pred_region
          %s1322 = sand.u32 %s36, 1
          %s1323 = scalar_lea.sflag [#allocation13], %s1322
          %s1324 = sand.u32 %s309, 1
          %s1325 = smul.addr %s1324, 64
          %s1326 = scalar_lea.vmem [#allocation12], %s1325
          %1327 = dma.done %s1323, 1024
        $region96: #{tpu_custom_call.1} parent=87 // pred_fallthru
          _
        // Predicated region
        $region97: #{tpu_custom_call.1} parent=87 // pred_check
          %p1328 = pneg %p354
        $region98: #{tpu_custom_call.1} parent=87 // pred_check_branch
          %1330 = sbr.rel (%p1328) target = $region100
        $region99: #{tpu_custom_call.1} parent=87 // pred_region
          %s1331 = sand.u32 %s36, 1
          %s1332 = scalar_lea.sflag [#allocation13], %s1331
          %s1333 = sand.u32 %s339, 1
          %s1334 = smul.addr %s1333, 64
          %s1335 = scalar_lea.vmem [#allocation14], %s1334
          %1336 = dma.done %s1332, 1024
        $region100: #{tpu_custom_call.1} parent=87 // pred_fallthru
          _
      $region88: #{tpu_custom_call.1} parent=5 // pred_fallthru
        _
    $region6: #{tpu_custom_call.1} parent=1 // loop_footer
      %s34 = sadd.s32 1, %s30
    $region7: #{tpu_custom_call.1} parent=1 // loop_footer_branch
      %29 = sbr.rel target = $region3
    $region8: #{tpu_custom_call.1} parent=1 // loop_exit
      _
    %1337 = vsyncpa [#allocation3], 1
    %s1338 = scalar_lea.sflag [#allocation3], 1
    %1339 = vsyncpa %s1338, 1
    %1340 = vsyncpa [#allocation6], 1
    %s1341 = scalar_lea.sflag [#allocation6], 1
    %1342 = vsyncpa %s1341, 1
    %1343 = vsyncpa [#allocation9], 1
    %1344 = vsyncpa [#allocation4], 1
    %s1345 = scalar_lea.sflag [#allocation4], 1
    %1346 = vsyncpa %s1345, 1
    %1347 = vsyncpa [#allocation13], 1
    %s1348 = scalar_lea.sflag [#allocation13], 1
    %1349 = vsyncpa %s1348, 1

</llo_original>
